<compile_context>
chip_gen: v7x
topology: tpu7x:2x2x1
jax: 0.10.0
libtpu: 0.0.40
codegen_flags: <defaults>
</compile_context>

<pallas_src>
import functools
import math

import jax
import jax.numpy as jnp
from jax import lax
from jax.experimental import pallas as pl
from jax.experimental.pallas import tpu as pltpu


def _mha_norm_kernel(x_ref, mask_ref,
                     wqkv_ref, bqkv_ref, wo_ref, bo_ref,
                     gamma_ref, beta_ref,
                     o_ref,
                     *, nhead, head_dim, eps):
    """One block of `block_b` batch elements per grid step."""
    bb, S, D = x_ref.shape
    cdt = wqkv_ref.dtype                      # matmul compute dtype (bf16)

    x = x_ref[...]                            # (bb, S, D) f32 (kept f32 for the residual)
    add_mask = mask_ref[...]                  # (bb, 1, S) f32, -1e30 where key is padded

    # ---- fused QKV projection on flattened rows: (bb*S, D) @ (D, 3D) -> f32 ----
    x2 = x.reshape(bb * S, D).astype(cdt)
    qkv = jnp.dot(x2, wqkv_ref[...], preferred_element_type=jnp.float32) + bqkv_ref[...]
    qkv = qkv.astype(cdt).reshape(bb, S, 3 * D)

    q = qkv[:, :, 0 * D:1 * D]                # (bb, S, D) bf16 (query scale already folded in)
    k = qkv[:, :, 1 * D:2 * D]
    v = qkv[:, :, 2 * D:3 * D]
    wo = wo_ref[...]                          # (D, D) bf16

    # ---- per-head attention; accumulate output projection (no head concat) ----
    proj = jnp.zeros((bb, S, D), jnp.float32)
    for h in range(nhead):                    # static, unrolled
        sl = slice(h * head_dim, (h + 1) * head_dim)
        qh, kh, vh = q[:, :, sl], k[:, :, sl], v[:, :, sl]

        # scores: contract head_dim of Q and K directly; batch over bb (no K transpose).
        s = lax.dot_general(qh, kh, (((2,), (2,)), ((0,), (0,))),
                            preferred_element_type=jnp.float32)        # (bb, S, S) f32
        s = s + add_mask                                                # broadcast over queries
        # TODO(synk): rows whose keys are all padded give a uniform distribution here,
        # whereas PyTorch would produce NaNs; acceptable for valid inputs.
        m = jnp.max(s, axis=-1, keepdims=True)
        p = jnp.exp(s - m)
        denom = jnp.sum(p, axis=-1, keepdims=True)
        p = p * pl.reciprocal(denom, approx=True)                       # EUP, not VALU divide

        ah = lax.dot_general(p.astype(cdt), vh, (((2,), (1,)), ((0,), (0,))),
                             preferred_element_type=jnp.float32)        # (bb, S, hd)
        # project against the sublane-sliced rows of Wo and accumulate (replaces concat + matmul)
        proj = proj + lax.dot_general(ah.astype(cdt), wo[sl, :],
                                      (((2,), (0,)), ((), ())),
                                      preferred_element_type=jnp.float32)   # (bb, S, D)

    # ---- output bias + residual + LayerNorm (all f32) ----
    y = proj + bo_ref[...] + x
    mean = jnp.mean(y, axis=-1, keepdims=True)
    var = jnp.mean(jnp.square(y - mean), axis=-1, keepdims=True)
    y_hat = (y - mean) * lax.rsqrt(var + eps)
    o_ref[...] = (y_hat * gamma_ref[...] + beta_ref[...]).astype(o_ref.dtype)


def prepare_params(params, *, nhead, matmul_dtype=jnp.bfloat16):
    """One-time parameter packing (outside the per-call path): transpose, fuse QKV,
    fold the 1/sqrt(head_dim) query scale, and cast matmul weights to bf16."""
    D = params["wq"].shape[0]
    head_dim = D // nhead
    scale = 1.0 / math.sqrt(head_dim)
    wqkv_t = jnp.concatenate(
        [params["wq"].T * scale, params["wk"].T, params["wv"].T], axis=1
    ).astype(matmul_dtype)                                          # (D, 3D)
    bqkv = jnp.concatenate(
        [params["bq"] * scale, params["bk"], params["bv"]]
    ).reshape(1, 3 * D).astype(jnp.float32)                         # (1, 3D)
    return {
        "wqkv_t": wqkv_t,
        "bqkv": bqkv,
        "wo_t": params["wo"].T.astype(matmul_dtype),                # (D, D)
        "bo": params["bo"].reshape(1, D).astype(jnp.float32),
        "gamma": params["gamma"].reshape(1, D).astype(jnp.float32),
        "beta": params["beta"].reshape(1, D).astype(jnp.float32),
        "nhead": nhead,
        "head_dim": head_dim,
    }


def _largest_divisor_leq(n, cap):
    for d in range(min(n, max(cap, 1)), 0, -1):
        if n % d == 0:
            return d
    return 1


def multihead_attention_and_norm(src, key_padding_mask, prepped, *, eps=1e-5, block_b=None):
    """src: (B, S, D) f32; key_padding_mask: (B, S) bool (True = padded key)."""
    B, S, D = src.shape
    nhead, head_dim = prepped["nhead"], prepped["head_dim"]

    # Several batch elements per grid step (sublane-denser tiles, fewer per-step overheads).
    if block_b is None:
        block_b = _largest_divisor_leq(B, max(1, 1024 // max(S, 1)))
    num_blocks = B // block_b

    # Additive mask precomputed outside the kernel: -1e30 where the key is padded.
    add_mask = jnp.where(key_padding_mask, jnp.float32(-1e30), jnp.float32(0.0))
    add_mask = add_mask.reshape(B, 1, S).astype(jnp.float32)

    kernel = functools.partial(_mha_norm_kernel, nhead=nhead, head_dim=head_dim, eps=eps)
    const = lambda shape: pl.BlockSpec(shape, lambda i: (0,) * len(shape))

    return pl.pallas_call(
        kernel,
        out_shape=jax.ShapeDtypeStruct((B, S, D), src.dtype),
        grid=(num_blocks,),
        in_specs=[
            pl.BlockSpec((block_b, S, D), lambda i: (i, 0, 0)),   # src block
            pl.BlockSpec((block_b, 1, S), lambda i: (i, 0, 0)),   # additive mask block
            const((D, 3 * D)),                                    # fused Wqkv^T (bf16, q pre-scaled)
            const((1, 3 * D)),                                    # fused qkv bias (f32)
            const((D, D)),                                        # Wo^T (bf16)
            const((1, D)),                                        # bo
            const((1, D)),                                        # LayerNorm gamma
            const((1, D)),                                        # LayerNorm beta
        ],
        out_specs=pl.BlockSpec((block_b, S, D), lambda i: (i, 0, 0)),
        compiler_params=pltpu.CompilerParams(dimension_semantics=("parallel",)),
    )(src, add_mask, prepped["wqkv_t"], prepped["bqkv"], prepped["wo_t"],
      prepped["bo"], prepped["gamma"], prepped["beta"])


def _reference(src, key_padding_mask, params, *, nhead, eps=1e-5):
    """Pure-JAX f32 reference reproducing nn.MultiheadAttention (eval) + residual + LayerNorm."""
    B, S, D = src.shape
    hd = D // nhead
    q = src @ params["wq"].T + params["bq"]
    k = src @ params["wk"].T + params["bk"]
    v = src @ params["wv"].T + params["bv"]

    def split(t):  # (B, S, D) -> (B, H, S, hd)
        return t.reshape(B, S, nhead, hd).transpose(0, 2, 1, 3)

    qh, kh, vh = split(q), split(k), split(v)
    scores = jnp.einsum("bhqd,bhkd->bhqk", qh, kh) / math.sqrt(hd)
    scores = scores + jnp.where(key_padding_mask[:, None, None, :], -1e30, 0.0)
    p = jax.nn.softmax(scores, axis=-1)
    o = jnp.einsum("bhqk,bhkd->bhqd", p, vh).transpose(0, 2, 1, 3).reshape(B, S, D)
    o = o @ params["wo"].T + params["bo"]
    y = o + src
    mean = y.mean(-1, keepdims=True)
    var = ((y - mean) ** 2).mean(-1, keepdims=True)
    return (y - mean) / jnp.sqrt(var + eps) * params["gamma"] + params["beta"]


if __name__ == "__main__":
    # Small, module-consistent shapes: batch=2, seq=8, d_model=32, nhead=4.
    B, S, D, H = 2, 8, 32, 4
    key = jax.random.PRNGKey(0)
    ks = jax.random.split(key, 6)

    src = jax.random.normal(ks[0], (B, S, D), dtype=jnp.float32)
    # key_padding_mask: True = padded key (ignored). Pad the tail of batch 1.
    key_padding_mask = jnp.zeros((B, S), dtype=bool).at[1, 5:].set(True)

    # Deterministic synthetic parameters (PyTorch layouts: Linear weight is (out, in)).
    in_proj_w = 0.05 * jax.random.normal(ks[1], (3 * D, D), dtype=jnp.float32)
    in_proj_b = 0.05 * jax.random.normal(ks[2], (3 * D,), dtype=jnp.float32)
    params = {
        "wq": in_proj_w[0 * D:1 * D], "wk": in_proj_w[1 * D:2 * D], "wv": in_proj_w[2 * D:3 * D],
        "bq": in_proj_b[0 * D:1 * D], "bk": in_proj_b[1 * D:2 * D], "bv": in_proj_b[2 * D:3 * D],
        "wo": 0.05 * jax.random.normal(ks[3], (D, D), dtype=jnp.float32),
        "bo": 0.05 * jax.random.normal(ks[4], (D,), dtype=jnp.float32),
        "gamma": jnp.ones((D,), dtype=jnp.float32),
        "beta": jnp.zeros((D,), dtype=jnp.float32),
    }

    prepped = prepare_params(params, nhead=H)              # one-time packing, outside call path
    out = multihead_attention_and_norm(src, key_padding_mask, prepped)
    out = jax.block_until_ready(out)

    ref = _reference(src, key_padding_mask, params, nhead=H)
    assert out.shape == (B, S, D)
    # bf16 matmul operands + approx reciprocal vs. pure-f32 reference -> modest tolerance.
    assert jnp.allclose(out, ref, atol=2e-2, rtol=2e-2), float(jnp.max(jnp.abs(out - ref)))

    print("KERNEL_OK")
</pallas_src>

<mosaic_0001>
module attributes {stable_mosaic.version = 11 : i64} {
  func.func @_mha_norm_kernel(%arg0: i32, %arg1: memref<2x8x32xf32, #tpu.memory_space<vmem>>, %arg2: memref<2x1x8xf32, #tpu.memory_space<vmem>>, %arg3: memref<32x96xbf16, #tpu.memory_space<vmem>>, %arg4: memref<1x96xf32, #tpu.memory_space<vmem>>, %arg5: memref<32x32xbf16, #tpu.memory_space<vmem>>, %arg6: memref<1x32xf32, #tpu.memory_space<vmem>>, %arg7: memref<1x32xf32, #tpu.memory_space<vmem>>, %arg8: memref<1x32xf32, #tpu.memory_space<vmem>>, %arg9: memref<2x8x32xf32, #tpu.memory_space<vmem>>) attributes {dimension_semantics = [#tpu.dimension_semantics<parallel>], iteration_bounds = array<i64: 1>, scalar_prefetch = 0 : i64, scratch_operands = 0 : i64, tpu.core_type = #tpu.core_type<tc>, window_params = [{transform_indices = @transform_0, window_bounds = array<i64: 2, 8, 32>}, {transform_indices = @transform_1, window_bounds = array<i64: 2, 1, 8>}, {pipeline_mode = #tpu.pipeline_mode<synchronous>, transform_indices = @transform_2, window_bounds = array<i64: 32, 96>}, {pipeline_mode = #tpu.pipeline_mode<synchronous>, transform_indices = @transform_3, window_bounds = array<i64: 1, 96>}, {pipeline_mode = #tpu.pipeline_mode<synchronous>, transform_indices = @transform_4, window_bounds = array<i64: 32, 32>}, {pipeline_mode = #tpu.pipeline_mode<synchronous>, transform_indices = @transform_5, window_bounds = array<i64: 1, 32>}, {pipeline_mode = #tpu.pipeline_mode<synchronous>, transform_indices = @transform_6, window_bounds = array<i64: 1, 32>}, {pipeline_mode = #tpu.pipeline_mode<synchronous>, transform_indices = @transform_7, window_bounds = array<i64: 1, 32>}, {transform_indices = @transform_8, window_bounds = array<i64: 2, 8, 32>}]} {
    %c0 = arith.constant 0 : index
    %c0_0 = arith.constant 0 : index
    %c0_1 = arith.constant 0 : index
    %0 = vector.load %arg1[%c0, %c0_0, %c0_1] : memref<2x8x32xf32, #tpu.memory_space<vmem>>, vector<2x8x32xf32>
    %c0_2 = arith.constant 0 : index
    %c0_3 = arith.constant 0 : index
    %c0_4 = arith.constant 0 : index
    %1 = vector.load %arg2[%c0_2, %c0_3, %c0_4] : memref<2x1x8xf32, #tpu.memory_space<vmem>>, vector<2x1x8xf32>
    %2 = vector.shape_cast %0 : vector<2x8x32xf32> to vector<16x32xf32>
    %3 = arith.truncf %2 : vector<16x32xf32> to vector<16x32xbf16>
    %c0_5 = arith.constant 0 : index
    %c0_6 = arith.constant 0 : index
    %4 = vector.load %arg3[%c0_5, %c0_6] : memref<32x96xbf16, #tpu.memory_space<vmem>>, vector<32x96xbf16>
    %cst = arith.constant dense<0.000000e+00> : vector<16x96xf32>
    %5 = tpu.matmul %3, %4, %cst {dimension_numbers = #tpu.dot_dimension_numbers<[1], [0], [0], [1], [0, 0, 1, 1], [], []>} : vector<16x32xbf16>, vector<32x96xbf16>, vector<16x96xf32> -> vector<16x96xf32>
    %c0_7 = arith.constant 0 : index
    %c0_8 = arith.constant 0 : index
    %6 = vector.load %arg4[%c0_7, %c0_8] : memref<1x96xf32, #tpu.memory_space<vmem>>, vector<1x96xf32>
    %7 = vector.broadcast %6 : vector<1x96xf32> to vector<16x96xf32>
    %8 = arith.addf %5, %7 : vector<16x96xf32>
    %9 = arith.truncf %8 : vector<16x96xf32> to vector<16x96xbf16>
    %10 = vector.shape_cast %9 : vector<16x96xbf16> to vector<2x8x96xbf16>
    %11 = vector.extract_strided_slice %10 {offsets = [0, 0, 0], sizes = [2, 8, 32], strides = [1, 1, 1]} : vector<2x8x96xbf16> to vector<2x8x32xbf16>
    %12 = vector.extract_strided_slice %10 {offsets = [0, 0, 32], sizes = [2, 8, 32], strides = [1, 1, 1]} : vector<2x8x96xbf16> to vector<2x8x32xbf16>
    %13 = vector.extract_strided_slice %10 {offsets = [0, 0, 64], sizes = [2, 8, 32], strides = [1, 1, 1]} : vector<2x8x96xbf16> to vector<2x8x32xbf16>
    %c0_9 = arith.constant 0 : index
    %c0_10 = arith.constant 0 : index
    %14 = vector.load %arg5[%c0_9, %c0_10] : memref<32x32xbf16, #tpu.memory_space<vmem>>, vector<32x32xbf16>
    %cst_11 = arith.constant 0.000000e+00 : f32
    %15 = vector.broadcast %cst_11 : f32 to vector<2x8x32xf32>
    %16 = vector.extract_strided_slice %11 {offsets = [0, 0, 0], sizes = [2, 8, 8], strides = [1, 1, 1]} : vector<2x8x32xbf16> to vector<2x8x8xbf16>
    %17 = vector.extract_strided_slice %12 {offsets = [0, 0, 0], sizes = [2, 8, 8], strides = [1, 1, 1]} : vector<2x8x32xbf16> to vector<2x8x8xbf16>
    %18 = vector.extract_strided_slice %13 {offsets = [0, 0, 0], sizes = [2, 8, 8], strides = [1, 1, 1]} : vector<2x8x32xbf16> to vector<2x8x8xbf16>
    %cst_12 = arith.constant dense<0.000000e+00> : vector<2x8x8xf32>
    %19 = tpu.matmul %16, %17, %cst_12 {dimension_numbers = #tpu.dot_dimension_numbers<[2], [2], [1], [1], [0, 0, 0, 1, 1, 1], [0], [0]>} : vector<2x8x8xbf16>, vector<2x8x8xbf16>, vector<2x8x8xf32> -> vector<2x8x8xf32>
    %20 = vector.broadcast %1 : vector<2x1x8xf32> to vector<2x8x8xf32>
    %21 = arith.addf %19, %20 : vector<2x8x8xf32>
    %cst_13 = arith.constant dense<0xFF800000> : vector<2x8xf32>
    %22 = vector.multi_reduction <maximumf>, %21, %cst_13 [2] : vector<2x8x8xf32> to vector<2x8xf32>
    %23 = vector.shape_cast %22 : vector<2x8xf32> to vector<2x8x1xf32>
    %24 = vector.broadcast %23 : vector<2x8x1xf32> to vector<2x8x8xf32>
    %25 = arith.subf %21, %24 : vector<2x8x8xf32>
    %26 = math.exp %25 : vector<2x8x8xf32>
    %cst_14 = arith.constant dense<0.000000e+00> : vector<2x8xf32>
    %27 = vector.multi_reduction <add>, %26, %cst_14 [2] : vector<2x8x8xf32> to vector<2x8xf32>
    %28 = vector.shape_cast %27 : vector<2x8xf32> to vector<2x8x1xf32>
    %29 = tpu.reciprocal %28 {approx = true} : vector<2x8x1xf32> -> vector<2x8x1xf32>
    %30 = vector.broadcast %29 : vector<2x8x1xf32> to vector<2x8x8xf32>
    %31 = arith.mulf %26, %30 : vector<2x8x8xf32>
    %32 = arith.truncf %31 : vector<2x8x8xf32> to vector<2x8x8xbf16>
    %cst_15 = arith.constant dense<0.000000e+00> : vector<2x8x8xf32>
    %33 = tpu.matmul %32, %18, %cst_15 {dimension_numbers = #tpu.dot_dimension_numbers<[2], [1], [1], [2], [0, 0, 0, 1, 1, 2], [0], [0]>} : vector<2x8x8xbf16>, vector<2x8x8xbf16>, vector<2x8x8xf32> -> vector<2x8x8xf32>
    %34 = arith.truncf %33 : vector<2x8x8xf32> to vector<2x8x8xbf16>
    %35 = vector.extract_strided_slice %14 {offsets = [0, 0], sizes = [8, 32], strides = [1, 1]} : vector<32x32xbf16> to vector<8x32xbf16>
    %cst_16 = arith.constant dense<0.000000e+00> : vector<2x8x32xf32>
    %36 = tpu.matmul %34, %35, %cst_16 {dimension_numbers = #tpu.dot_dimension_numbers<[2], [0], [0, 1], [1], [0, 0, 0, 1, 1, 1], [], []>} : vector<2x8x8xbf16>, vector<8x32xbf16>, vector<2x8x32xf32> -> vector<2x8x32xf32>
    %37 = arith.addf %15, %36 : vector<2x8x32xf32>
    %38 = vector.extract_strided_slice %11 {offsets = [0, 0, 8], sizes = [2, 8, 8], strides = [1, 1, 1]} : vector<2x8x32xbf16> to vector<2x8x8xbf16>
    %39 = vector.extract_strided_slice %12 {offsets = [0, 0, 8], sizes = [2, 8, 8], strides = [1, 1, 1]} : vector<2x8x32xbf16> to vector<2x8x8xbf16>
    %40 = vector.extract_strided_slice %13 {offsets = [0, 0, 8], sizes = [2, 8, 8], strides = [1, 1, 1]} : vector<2x8x32xbf16> to vector<2x8x8xbf16>
    %cst_17 = arith.constant dense<0.000000e+00> : vector<2x8x8xf32>
    %41 = tpu.matmul %38, %39, %cst_17 {dimension_numbers = #tpu.dot_dimension_numbers<[2], [2], [1], [1], [0, 0, 0, 1, 1, 1], [0], [0]>} : vector<2x8x8xbf16>, vector<2x8x8xbf16>, vector<2x8x8xf32> -> vector<2x8x8xf32>
    %42 = vector.broadcast %1 : vector<2x1x8xf32> to vector<2x8x8xf32>
    %43 = arith.addf %41, %42 : vector<2x8x8xf32>
    %cst_18 = arith.constant dense<0xFF800000> : vector<2x8xf32>
    %44 = vector.multi_reduction <maximumf>, %43, %cst_18 [2] : vector<2x8x8xf32> to vector<2x8xf32>
    %45 = vector.shape_cast %44 : vector<2x8xf32> to vector<2x8x1xf32>
    %46 = vector.broadcast %45 : vector<2x8x1xf32> to vector<2x8x8xf32>
    %47 = arith.subf %43, %46 : vector<2x8x8xf32>
    %48 = math.exp %47 : vector<2x8x8xf32>
    %cst_19 = arith.constant dense<0.000000e+00> : vector<2x8xf32>
    %49 = vector.multi_reduction <add>, %48, %cst_19 [2] : vector<2x8x8xf32> to vector<2x8xf32>
    %50 = vector.shape_cast %49 : vector<2x8xf32> to vector<2x8x1xf32>
    %51 = tpu.reciprocal %50 {approx = true} : vector<2x8x1xf32> -> vector<2x8x1xf32>
    %52 = vector.broadcast %51 : vector<2x8x1xf32> to vector<2x8x8xf32>
    %53 = arith.mulf %48, %52 : vector<2x8x8xf32>
    %54 = arith.truncf %53 : vector<2x8x8xf32> to vector<2x8x8xbf16>
    %cst_20 = arith.constant dense<0.000000e+00> : vector<2x8x8xf32>
    %55 = tpu.matmul %54, %40, %cst_20 {dimension_numbers = #tpu.dot_dimension_numbers<[2], [1], [1], [2], [0, 0, 0, 1, 1, 2], [0], [0]>} : vector<2x8x8xbf16>, vector<2x8x8xbf16>, vector<2x8x8xf32> -> vector<2x8x8xf32>
    %56 = arith.truncf %55 : vector<2x8x8xf32> to vector<2x8x8xbf16>
    %57 = vector.extract_strided_slice %14 {offsets = [8, 0], sizes = [8, 32], strides = [1, 1]} : vector<32x32xbf16> to vector<8x32xbf16>
    %cst_21 = arith.constant dense<0.000000e+00> : vector<2x8x32xf32>
    %58 = tpu.matmul %56, %57, %cst_21 {dimension_numbers = #tpu.dot_dimension_numbers<[2], [0], [0, 1], [1], [0, 0, 0, 1, 1, 1], [], []>} : vector<2x8x8xbf16>, vector<8x32xbf16>, vector<2x8x32xf32> -> vector<2x8x32xf32>
    %59 = arith.addf %37, %58 : vector<2x8x32xf32>
    %60 = vector.extract_strided_slice %11 {offsets = [0, 0, 16], sizes = [2, 8, 8], strides = [1, 1, 1]} : vector<2x8x32xbf16> to vector<2x8x8xbf16>
    %61 = vector.extract_strided_slice %12 {offsets = [0, 0, 16], sizes = [2, 8, 8], strides = [1, 1, 1]} : vector<2x8x32xbf16> to vector<2x8x8xbf16>
    %62 = vector.extract_strided_slice %13 {offsets = [0, 0, 16], sizes = [2, 8, 8], strides = [1, 1, 1]} : vector<2x8x32xbf16> to vector<2x8x8xbf16>
    %cst_22 = arith.constant dense<0.000000e+00> : vector<2x8x8xf32>
    %63 = tpu.matmul %60, %61, %cst_22 {dimension_numbers = #tpu.dot_dimension_numbers<[2], [2], [1], [1], [0, 0, 0, 1, 1, 1], [0], [0]>} : vector<2x8x8xbf16>, vector<2x8x8xbf16>, vector<2x8x8xf32> -> vector<2x8x8xf32>
    %64 = vector.broadcast %1 : vector<2x1x8xf32> to vector<2x8x8xf32>
    %65 = arith.addf %63, %64 : vector<2x8x8xf32>
    %cst_23 = arith.constant dense<0xFF800000> : vector<2x8xf32>
    %66 = vector.multi_reduction <maximumf>, %65, %cst_23 [2] : vector<2x8x8xf32> to vector<2x8xf32>
    %67 = vector.shape_cast %66 : vector<2x8xf32> to vector<2x8x1xf32>
    %68 = vector.broadcast %67 : vector<2x8x1xf32> to vector<2x8x8xf32>
    %69 = arith.subf %65, %68 : vector<2x8x8xf32>
    %70 = math.exp %69 : vector<2x8x8xf32>
    %cst_24 = arith.constant dense<0.000000e+00> : vector<2x8xf32>
    %71 = vector.multi_reduction <add>, %70, %cst_24 [2] : vector<2x8x8xf32> to vector<2x8xf32>
    %72 = vector.shape_cast %71 : vector<2x8xf32> to vector<2x8x1xf32>
    %73 = tpu.reciprocal %72 {approx = true} : vector<2x8x1xf32> -> vector<2x8x1xf32>
    %74 = vector.broadcast %73 : vector<2x8x1xf32> to vector<2x8x8xf32>
    %75 = arith.mulf %70, %74 : vector<2x8x8xf32>
    %76 = arith.truncf %75 : vector<2x8x8xf32> to vector<2x8x8xbf16>
    %cst_25 = arith.constant dense<0.000000e+00> : vector<2x8x8xf32>
    %77 = tpu.matmul %76, %62, %cst_25 {dimension_numbers = #tpu.dot_dimension_numbers<[2], [1], [1], [2], [0, 0, 0, 1, 1, 2], [0], [0]>} : vector<2x8x8xbf16>, vector<2x8x8xbf16>, vector<2x8x8xf32> -> vector<2x8x8xf32>
    %78 = arith.truncf %77 : vector<2x8x8xf32> to vector<2x8x8xbf16>
    %79 = vector.extract_strided_slice %14 {offsets = [16, 0], sizes = [8, 32], strides = [1, 1]} : vector<32x32xbf16> to vector<8x32xbf16>
    %cst_26 = arith.constant dense<0.000000e+00> : vector<2x8x32xf32>
    %80 = tpu.matmul %78, %79, %cst_26 {dimension_numbers = #tpu.dot_dimension_numbers<[2], [0], [0, 1], [1], [0, 0, 0, 1, 1, 1], [], []>} : vector<2x8x8xbf16>, vector<8x32xbf16>, vector<2x8x32xf32> -> vector<2x8x32xf32>
    %81 = arith.addf %59, %80 : vector<2x8x32xf32>
    %82 = vector.extract_strided_slice %11 {offsets = [0, 0, 24], sizes = [2, 8, 8], strides = [1, 1, 1]} : vector<2x8x32xbf16> to vector<2x8x8xbf16>
    %83 = vector.extract_strided_slice %12 {offsets = [0, 0, 24], sizes = [2, 8, 8], strides = [1, 1, 1]} : vector<2x8x32xbf16> to vector<2x8x8xbf16>
    %84 = vector.extract_strided_slice %13 {offsets = [0, 0, 24], sizes = [2, 8, 8], strides = [1, 1, 1]} : vector<2x8x32xbf16> to vector<2x8x8xbf16>
    %cst_27 = arith.constant dense<0.000000e+00> : vector<2x8x8xf32>
    %85 = tpu.matmul %82, %83, %cst_27 {dimension_numbers = #tpu.dot_dimension_numbers<[2], [2], [1], [1], [0, 0, 0, 1, 1, 1], [0], [0]>} : vector<2x8x8xbf16>, vector<2x8x8xbf16>, vector<2x8x8xf32> -> vector<2x8x8xf32>
    %86 = vector.broadcast %1 : vector<2x1x8xf32> to vector<2x8x8xf32>
    %87 = arith.addf %85, %86 : vector<2x8x8xf32>
    %cst_28 = arith.constant dense<0xFF800000> : vector<2x8xf32>
    %88 = vector.multi_reduction <maximumf>, %87, %cst_28 [2] : vector<2x8x8xf32> to vector<2x8xf32>
    %89 = vector.shape_cast %88 : vector<2x8xf32> to vector<2x8x1xf32>
    %90 = vector.broadcast %89 : vector<2x8x1xf32> to vector<2x8x8xf32>
    %91 = arith.subf %87, %90 : vector<2x8x8xf32>
    %92 = math.exp %91 : vector<2x8x8xf32>
    %cst_29 = arith.constant dense<0.000000e+00> : vector<2x8xf32>
    %93 = vector.multi_reduction <add>, %92, %cst_29 [2] : vector<2x8x8xf32> to vector<2x8xf32>
    %94 = vector.shape_cast %93 : vector<2x8xf32> to vector<2x8x1xf32>
    %95 = tpu.reciprocal %94 {approx = true} : vector<2x8x1xf32> -> vector<2x8x1xf32>
    %96 = vector.broadcast %95 : vector<2x8x1xf32> to vector<2x8x8xf32>
    %97 = arith.mulf %92, %96 : vector<2x8x8xf32>
    %98 = arith.truncf %97 : vector<2x8x8xf32> to vector<2x8x8xbf16>
    %cst_30 = arith.constant dense<0.000000e+00> : vector<2x8x8xf32>
    %99 = tpu.matmul %98, %84, %cst_30 {dimension_numbers = #tpu.dot_dimension_numbers<[2], [1], [1], [2], [0, 0, 0, 1, 1, 2], [0], [0]>} : vector<2x8x8xbf16>, vector<2x8x8xbf16>, vector<2x8x8xf32> -> vector<2x8x8xf32>
    %100 = arith.truncf %99 : vector<2x8x8xf32> to vector<2x8x8xbf16>
    %101 = vector.extract_strided_slice %14 {offsets = [24, 0], sizes = [8, 32], strides = [1, 1]} : vector<32x32xbf16> to vector<8x32xbf16>
    %cst_31 = arith.constant dense<0.000000e+00> : vector<2x8x32xf32>
    %102 = tpu.matmul %100, %101, %cst_31 {dimension_numbers = #tpu.dot_dimension_numbers<[2], [0], [0, 1], [1], [0, 0, 0, 1, 1, 1], [], []>} : vector<2x8x8xbf16>, vector<8x32xbf16>, vector<2x8x32xf32> -> vector<2x8x32xf32>
    %103 = arith.addf %81, %102 : vector<2x8x32xf32>
    %c0_32 = arith.constant 0 : index
    %c0_33 = arith.constant 0 : index
    %104 = vector.load %arg6[%c0_32, %c0_33] : memref<1x32xf32, #tpu.memory_space<vmem>>, vector<1x32xf32>
    %105 = vector.shape_cast %104 : vector<1x32xf32> to vector<1x1x32xf32>
    %106 = vector.broadcast %105 : vector<1x1x32xf32> to vector<2x8x32xf32>
    %107 = arith.addf %103, %106 : vector<2x8x32xf32>
    %108 = arith.addf %107, %0 : vector<2x8x32xf32>
    %cst_34 = arith.constant dense<0.000000e+00> : vector<2x8xf32>
    %109 = vector.multi_reduction <add>, %108, %cst_34 [2] : vector<2x8x32xf32> to vector<2x8xf32>
    %110 = vector.shape_cast %109 : vector<2x8xf32> to vector<2x8x1xf32>
    %cst_35 = arith.constant 3.200000e+01 : f32
    %111 = vector.broadcast %cst_35 : f32 to vector<2x8x1xf32>
    %112 = arith.divf %110, %111 : vector<2x8x1xf32>
    %113 = vector.broadcast %112 : vector<2x8x1xf32> to vector<2x8x32xf32>
    %114 = arith.subf %108, %113 : vector<2x8x32xf32>
    %115 = arith.mulf %114, %114 : vector<2x8x32xf32>
    %cst_36 = arith.constant dense<0.000000e+00> : vector<2x8xf32>
    %116 = vector.multi_reduction <add>, %115, %cst_36 [2] : vector<2x8x32xf32> to vector<2x8xf32>
    %117 = vector.shape_cast %116 : vector<2x8xf32> to vector<2x8x1xf32>
    %cst_37 = arith.constant 3.200000e+01 : f32
    %118 = vector.broadcast %cst_37 : f32 to vector<2x8x1xf32>
    %119 = arith.divf %117, %118 : vector<2x8x1xf32>
    %120 = vector.broadcast %112 : vector<2x8x1xf32> to vector<2x8x32xf32>
    %121 = arith.subf %108, %120 : vector<2x8x32xf32>
    %cst_38 = arith.constant 9.99999974E-6 : f32
    %122 = vector.broadcast %cst_38 : f32 to vector<2x8x1xf32>
    %123 = arith.addf %119, %122 : vector<2x8x1xf32>
    %124 = math.rsqrt %123 : vector<2x8x1xf32>
    %125 = vector.broadcast %124 : vector<2x8x1xf32> to vector<2x8x32xf32>
    %126 = arith.mulf %121, %125 : vector<2x8x32xf32>
    %c0_39 = arith.constant 0 : index
    %c0_40 = arith.constant 0 : index
    %127 = vector.load %arg7[%c0_39, %c0_40] : memref<1x32xf32, #tpu.memory_space<vmem>>, vector<1x32xf32>
    %128 = vector.shape_cast %127 : vector<1x32xf32> to vector<1x1x32xf32>
    %129 = vector.broadcast %128 : vector<1x1x32xf32> to vector<2x8x32xf32>
    %130 = arith.mulf %126, %129 : vector<2x8x32xf32>
    %c0_41 = arith.constant 0 : index
    %c0_42 = arith.constant 0 : index
    %131 = vector.load %arg8[%c0_41, %c0_42] : memref<1x32xf32, #tpu.memory_space<vmem>>, vector<1x32xf32>
    %132 = vector.shape_cast %131 : vector<1x32xf32> to vector<1x1x32xf32>
    %133 = vector.broadcast %132 : vector<1x1x32xf32> to vector<2x8x32xf32>
    %134 = arith.addf %130, %133 : vector<2x8x32xf32>
    %c0_43 = arith.constant 0 : index
    %c0_44 = arith.constant 0 : index
    %c0_45 = arith.constant 0 : index
    %135 = vector.load %arg9[%c0_43, %c0_44, %c0_45] : memref<2x8x32xf32, #tpu.memory_space<vmem>>, vector<2x8x32xf32>
    tpu.vector_store %arg9[%c0_43, %c0_44, %c0_45], %134 {strides = array<i32>} : memref<2x8x32xf32, #tpu.memory_space<vmem>>, vector<2x8x32xf32>,
    return
  }
  func.func @transform_0(%arg0: i32) -> (i32, i32, i32) {
    %c0_i32 = arith.constant 0 : i32
    %c0_i32_0 = arith.constant 0 : i32
    %c0_i32_1 = arith.constant 0 : i32
    return %arg0, %c0_i32, %c0_i32_0 : i32, i32, i32
  }
  func.func @transform_1(%arg0: i32) -> (i32, i32, i32) {
    %c0_i32 = arith.constant 0 : i32
    %c0_i32_0 = arith.constant 0 : i32
    %c0_i32_1 = arith.constant 0 : i32
    return %arg0, %c0_i32, %c0_i32_0 : i32, i32, i32
  }
  func.func @transform_2(%arg0: i32) -> (i32, i32) {
    %c0_i32 = arith.constant 0 : i32
    %c0_i32_0 = arith.constant 0 : i32
    %c0_i32_1 = arith.constant 0 : i32
    return %c0_i32, %c0_i32_0 : i32, i32
  }
  func.func @transform_3(%arg0: i32) -> (i32, i32) {
    %c0_i32 = arith.constant 0 : i32
    %c0_i32_0 = arith.constant 0 : i32
    %c0_i32_1 = arith.constant 0 : i32
    return %c0_i32, %c0_i32_0 : i32, i32
  }
  func.func @transform_4(%arg0: i32) -> (i32, i32) {
    %c0_i32 = arith.constant 0 : i32
    %c0_i32_0 = arith.constant 0 : i32
    %c0_i32_1 = arith.constant 0 : i32
    return %c0_i32, %c0_i32_0 : i32, i32
  }
  func.func @transform_5(%arg0: i32) -> (i32, i32) {
    %c0_i32 = arith.constant 0 : i32
    %c0_i32_0 = arith.constant 0 : i32
    %c0_i32_1 = arith.constant 0 : i32
    return %c0_i32, %c0_i32_0 : i32, i32
  }
  func.func @transform_6(%arg0: i32) -> (i32, i32) {
    %c0_i32 = arith.constant 0 : i32
    %c0_i32_0 = arith.constant 0 : i32
    %c0_i32_1 = arith.constant 0 : i32
    return %c0_i32, %c0_i32_0 : i32, i32
  }
  func.func @transform_7(%arg0: i32) -> (i32, i32) {
    %c0_i32 = arith.constant 0 : i32
    %c0_i32_0 = arith.constant 0 : i32
    %c0_i32_1 = arith.constant 0 : i32
    return %c0_i32, %c0_i32_0 : i32, i32
  }
  func.func @transform_8(%arg0: i32) -> (i32, i32, i32) {
    %c0_i32 = arith.constant 0 : i32
    %c0_i32_0 = arith.constant 0 : i32
    %c0_i32_1 = arith.constant 0 : i32
    return %arg0, %c0_i32, %c0_i32_0 : i32, i32, i32
  }
}

</mosaic_0001>

<llo_original>
// kernel: tpu_custom_call.1
$region0: #{tpu_custom_call.1}
  #allocation0 [shape = 'u32[]', space=smem, size = 0x4, offset = 0x4, fixed_abs, tag = 'smem constant byte address 0x4 - core index']
  #allocation1 [shape = 'u32[144,128]{1,0:T(1,128)}', space=vmem, size = 0x12000, scoped, tag = 'internal scratch']
  %s0 = inlined_call_operand.hbm [shape: f32[2,8,32], index: 0, kind: input, shape index: {}]
  %s1 = inlined_call_operand.vmem [shape: f32[2,1,8], index: 1, kind: input, shape index: {}]
  %s2 = inlined_call_operand.hbm [shape: bf16[32,96], index: 2, kind: input, shape index: {}]
  %s3 = inlined_call_operand.vmem [shape: f32[1,96], index: 3, kind: input, shape index: {}]
  %s4 = inlined_call_operand.hbm [shape: bf16[32,32], index: 4, kind: input, shape index: {}]
  %s5 = inlined_call_operand.vmem [shape: f32[1,32], index: 5, kind: input, shape index: {}]
  %s6 = inlined_call_operand.vmem [shape: f32[1,32], index: 6, kind: input, shape index: {}]
  %s7 = inlined_call_operand.vmem [shape: f32[1,32], index: 7, kind: input, shape index: {}]
  %s8 = inlined_call_operand.hbm [shape: f32[2,8,32], index: 8, kind: output, shape index: {}]
  %s9 = sld [smem:[#allocation0]]
  $region54: #{tpu_custom_call.1} parent=0
    _
  %s11 = ssub.s32 1, %s9
  %s12 = scalar_select 0, %s11, %s9
  $region1: #{tpu_custom_call.1} parent=0
    #allocation2 [shape = 'u8[8192]{0}', space=vmem, size = 0x2000, scoped, tag = 'input window, operand 0, single buffered']
    #allocation3 [shape = 's32[1]{0}', space=sflag, size = 0x4, scoped, tag = 'scoped memory for tpu_custom_call.1']
    #allocation4 [shape = 's32[1]{0}', space=sflag, size = 0x4, scoped, tag = 'scoped memory for tpu_custom_call.1']
    #allocation5 [shape = 'u8[8192]{0}', space=vmem, size = 0x2000, scoped, tag = 'input window, operand 2, single buffered']
    #allocation6 [shape = 's32[1]{0}', space=sflag, size = 0x4, scoped, tag = 'scoped memory for tpu_custom_call.1']
    #allocation7 [shape = 'u8[8192]{0}', space=vmem, size = 0x2000, scoped, tag = 'input window, operand 4, single buffered']
    #allocation8 [shape = 'u8[8192]{0}', space=vmem, size = 0x2000, scoped, tag = 'output window, operand 0, single buffered']
    %13 = vsyncpa [#allocation3], 0
    %14 = vsyncpa [#allocation6], 0
    %15 = vsyncpa [#allocation4], 0
    // Predicated region
    $region2: #{tpu_custom_call.1} parent=1 // pred_check
      _
    $region3: #{tpu_custom_call.1} parent=1 // pred_check_branch
      %17 = sbr.rel (0) target = $region5
    $region4: #{tpu_custom_call.1} parent=1 // pred_region
      %s19 = ssub.s32 256, 256
      %20 = vsyncadd [#allocation3], %s19
      %s21 = sshll.u32 [#allocation2], 4
      %s22 = int_to_ptr.vmem [resolvable:$true] %s21
      %27 = dma.hbm_to_vmem [thread:$0]  %s0, 256, %s22, [#allocation3], 128, 128, 8
    $region5: #{tpu_custom_call.1} parent=1 // pred_fallthru
      _
    // Predicated region
    $region6: #{tpu_custom_call.1} parent=1 // pred_check
      _
    $region7: #{tpu_custom_call.1} parent=1 // pred_check_branch
      %29 = sbr.rel (0) target = $region9
    $region8: #{tpu_custom_call.1} parent=1 // pred_region
      _
    $region9: #{tpu_custom_call.1} parent=1 // pred_fallthru
      _
    // Predicated region
    $region10: #{tpu_custom_call.1} parent=1 // pred_check
      _
    $region11: #{tpu_custom_call.1} parent=1 // pred_check_branch
      %31 = sbr.rel (0) target = $region13
    $region12: #{tpu_custom_call.1} parent=1 // pred_region
      %s33 = ssub.s32 256, 256
      %34 = vsyncadd [#allocation6], %s33
      %s35 = sshll.u32 [#allocation5], 4
      %s36 = int_to_ptr.vmem [resolvable:$true] %s35
      %41 = dma.hbm_to_vmem [thread:$0]  %s2, 256, %s36, [#allocation6], 64, 64, 4
    $region13: #{tpu_custom_call.1} parent=1 // pred_fallthru
      _
    // Predicated region
    $region14: #{tpu_custom_call.1} parent=1 // pred_check
      _
    $region15: #{tpu_custom_call.1} parent=1 // pred_check_branch
      %43 = sbr.rel (0) target = $region17
    $region16: #{tpu_custom_call.1} parent=1 // pred_region
      _
    $region17: #{tpu_custom_call.1} parent=1 // pred_fallthru
      _
    // Predicated region
    $region18: #{tpu_custom_call.1} parent=1 // pred_check
      _
    $region19: #{tpu_custom_call.1} parent=1 // pred_check_branch
      %45 = sbr.rel (0) target = $region21
    $region20: #{tpu_custom_call.1} parent=1 // pred_region
      %s47 = ssub.s32 256, 256
      %48 = vsyncadd [#allocation6], %s47
      %s49 = sshll.u32 [#allocation7], 4
      %s50 = int_to_ptr.vmem [resolvable:$true] %s49
      %55 = dma.hbm_to_vmem [thread:$0]  %s4, 256, %s50, [#allocation6], 64, 64, 4
    $region21: #{tpu_custom_call.1} parent=1 // pred_fallthru
      _
    // Predicated region
    $region22: #{tpu_custom_call.1} parent=1 // pred_check
      _
    $region23: #{tpu_custom_call.1} parent=1 // pred_check_branch
      %57 = sbr.rel (0) target = $region25
    $region24: #{tpu_custom_call.1} parent=1 // pred_region
      _
    $region25: #{tpu_custom_call.1} parent=1 // pred_fallthru
      _
    // Predicated region
    $region26: #{tpu_custom_call.1} parent=1 // pred_check
      _
    $region27: #{tpu_custom_call.1} parent=1 // pred_check_branch
      %59 = sbr.rel (0) target = $region29
    $region28: #{tpu_custom_call.1} parent=1 // pred_region
      _
    $region29: #{tpu_custom_call.1} parent=1 // pred_fallthru
      _
    // Predicated region
    $region30: #{tpu_custom_call.1} parent=1 // pred_check
      _
    $region31: #{tpu_custom_call.1} parent=1 // pred_check_branch
      %61 = sbr.rel (0) target = $region33
    $region32: #{tpu_custom_call.1} parent=1 // pred_region
      _
    $region33: #{tpu_custom_call.1} parent=1 // pred_fallthru
      _
    // Predicated region
    $region34: #{tpu_custom_call.1} parent=1 // pred_check
      _
    $region35: #{tpu_custom_call.1} parent=1 // pred_check_branch
      %63 = sbr.rel (0) target = $region37
    $region36: #{tpu_custom_call.1} parent=1 // pred_region
      %64 = dma.done [#allocation3], 256
    $region37: #{tpu_custom_call.1} parent=1 // pred_fallthru
      _
    // Predicated region
    $region38: #{tpu_custom_call.1} parent=1 // pred_check
      _
    $region39: #{tpu_custom_call.1} parent=1 // pred_check_branch
      %66 = sbr.rel (0) target = $region41
    $region40: #{tpu_custom_call.1} parent=1 // pred_region
      %67 = dma.done [#allocation6], 256
    $region41: #{tpu_custom_call.1} parent=1 // pred_fallthru
      _
    // Predicated region
    $region42: #{tpu_custom_call.1} parent=1 // pred_check
      _
    $region43: #{tpu_custom_call.1} parent=1 // pred_check_branch
      %69 = sbr.rel (0) target = $region45
    $region44: #{tpu_custom_call.1} parent=1 // pred_region
      %70 = dma.done [#allocation6], 256
    $region45: #{tpu_custom_call.1} parent=1 // pred_fallthru
      _
    %v72 = vld [vmem:[#allocation2] sm:$0xff]
    %v73 = vld [vmem:[#allocation2 + $0x8] sm:$0xff]
    %v74 = vld [vmem:[%s1] sm:$0x1]
    %v75 = vld [vmem:[%s1 + $0x1] sm:$0x1]
    %v76 = vpack.c.bf16 %v73, %v72
    %v77 = vld [vmem:[#allocation5] sm:$0xf]
    %v78 = vld [vmem:[#allocation5 + $0x4] sm:$0xf]
    %v79 = vld [vmem:[#allocation5 + $0x8] sm:$0xf]
    %v80 = vld [vmem:[#allocation5 + $0xc] sm:$0xf]
    %v81 = vld [vmem:[%s3] sm:$0x1]
    %v83 = vlaneseq
    %v84 = vshrl.u32 %v83, 7
    %v85 = vsub.s32 0, %v84
    %v86 = vrot.slane %v81, %v85
    %v92 = vunpack.c.l.b16 %v77
    %v93 = vunpack.c.l.b16 %v78
    %v94 = vunpack.c.l.b16 %v79
    %v95 = vunpack.c.l.b16 %v80
    %v96 = vpack.c.b16 %v93, %v92
    %v97 = vpack.c.b16 %v95, %v94
    %vm100 = vcmask 261120
    %v102 = vsel %vm100, %v76, 0
    %104 = vmatprep.subr.bf16.mxu0 0
    %105 = vmatpush1.bf16.msra.mxu0 %v96
    %106 = vmatprep.subr.bf16.mxu0 0
    %107 = vmatpush1.bf16.msra.mxu0 %v97
    %108 = vmatprep.subr.bf16.mxu0 0
    %109 = vmatpush1.bf16.msra.mxu0 0
    %110 = vmatprep.subr.bf16.mxu0 0
    %111 = vmatpush1.bf16.msra.mxu0 0
    %112 = vmatprep.subr.bf16.mxu0 0
    %113 = vmatpush1.bf16.msra.mxu0 0
    %114 = vmatprep.subr.bf16.mxu0 0
    %115 = vmatpush1.bf16.msra.mxu0 0
    %116 = vmatprep.subr.bf16.mxu0 0
    %117 = vmatpush1.bf16.msra.mxu0 0
    %118 = vmatprep.subr.bf16.mxu0 0
    %119 = vmatpush1.bf16.msra.mxu0 0
    %120 = vmatprep.subr.bf16.mxu0 0
    %121 = vmatpush1.bf16.msra.mxu0 0
    %122 = vmatprep.subr.bf16.mxu0 0
    %123 = vmatpush1.bf16.msra.mxu0 0
    %124 = vmatprep.subr.bf16.mxu0 0
    %125 = vmatpush1.bf16.msra.mxu0 0
    %126 = vmatprep.subr.bf16.mxu0 0
    %127 = vmatpush1.bf16.msra.mxu0 0
    %128 = vmatprep.subr.bf16.mxu0 0
    %129 = vmatpush1.bf16.msra.mxu0 0
    %130 = vmatprep.subr.bf16.mxu0 0
    %131 = vmatpush1.bf16.msra.mxu0 0
    %132 = vmatprep.subr.bf16.mxu0 0
    %133 = vmatpush1.bf16.msra.mxu0 0
    %134 = vmatprep.subr.bf16.mxu0 0
    %135 = vmatpush1.bf16.msra.mxu0 0
    %136 = vmatprep.mubr.bf16.mxu0 0
    %137 = vmatmul.mubr.bf16.gmra.mrb[0].mxu0 %v102
    %v138 = vpop.f32.mrb[0].mxu0
    %v139 = vadd.f32 %v86, %v138
    %v140 = vpop.f32.mrb[0].mxu0
    %v141 = vpop.f32.mrb[0].mxu0
    %v142 = vadd.f32 %v86, %v141
    %v143 = vpop.f32.mrb[0].mxu0
    %144 = vdwg.mxu0
    %v145 = vpack.c.bf16 %v142, %v139
    %v147 = vunpack.c.l.b16 %v145
    %v148 = vunpack.c.h.b16 %v145
    %v149 = vpack.c.b16 %v147, %v147
    %v150 = vpack.c.b16 %v148, %v148
    %v151 = vld [vmem:[#allocation7] sm:$0xf]
    %v152 = vld [vmem:[#allocation7 + $0x4] sm:$0xf]
    %v153 = vld [vmem:[#allocation7 + $0x8] sm:$0xf]
    %v154 = vld [vmem:[#allocation7 + $0xc] sm:$0xf]
    %v157 = vlaneseq
    %v158 = vshrl.u32 %v157, 7
    %v159 = vsub.s32 0, %v158
    %v160 = vrot.slane %v74, %v159
    %v161 = vlaneseq
    %v162 = vshrl.u32 %v161, 7
    %v163 = vsub.s32 0, %v162
    %v164 = vrot.slane %v75, %v163
    %167 = vrot.lane.b32.xlu0 %v149, 96
    %v168 = vpop.permute.xlu0 %167
    %vm169 = vcmask 64512
    %v171 = vsel %vm169, %v149, 0
    %v174 = vsel %vm169, %v168, 0
    %176 = vmatprep.subr.bf16.mxu0 0
    %177 = vmatpush1.bf16.xpose.msra.mxu0 %v174
    %178 = vmatprep.subr.bf16.mxu0 0
    %179 = vmatpush1.bf16.xpose.msra.mxu0 0
    %180 = vmatprep.subr.bf16.mxu0 0
    %181 = vmatpush1.bf16.xpose.msra.mxu0 0
    %182 = vmatprep.subr.bf16.mxu0 0
    %183 = vmatpush1.bf16.xpose.msra.mxu0 0
    %184 = vmatprep.subr.bf16.mxu0 0
    %185 = vmatpush1.bf16.xpose.msra.mxu0 0
    %186 = vmatprep.subr.bf16.mxu0 0
    %187 = vmatpush1.bf16.xpose.msra.mxu0 0
    %188 = vmatprep.subr.bf16.mxu0 0
    %189 = vmatpush1.bf16.xpose.msra.mxu0 0
    %190 = vmatprep.subr.bf16.mxu0 0
    %191 = vmatpush1.bf16.xpose.msra.mxu0 0
    %192 = vmatprep.subr.bf16.mxu0 0
    %193 = vmatpush1.bf16.xpose.msra.mxu0 0
    %194 = vmatprep.subr.bf16.mxu0 0
    %195 = vmatpush1.bf16.xpose.msra.mxu0 0
    %196 = vmatprep.subr.bf16.mxu0 0
    %197 = vmatpush1.bf16.xpose.msra.mxu0 0
    %198 = vmatprep.subr.bf16.mxu0 0
    %199 = vmatpush1.bf16.xpose.msra.mxu0 0
    %200 = vmatprep.subr.bf16.mxu0 0
    %201 = vmatpush1.bf16.xpose.msra.mxu0 0
    %202 = vmatprep.subr.bf16.mxu0 0
    %203 = vmatpush1.bf16.xpose.msra.mxu0 0
    %204 = vmatprep.subr.bf16.mxu0 0
    %205 = vmatpush1.bf16.xpose.msra.mxu0 0
    %206 = vmatprep.subr.bf16.mxu0 0
    %207 = vmatpush1.bf16.xpose.msra.mxu0 0
    %208 = vmatprep.mubr.bf16.mxu0 0
    %209 = vmatmul.mubr.bf16.gmra.mrb[0].mxu0 %v171
    %v210 = vpop.f32.mrb[0].mxu0
    %v211 = vadd.f32 %v160, %v210
    %v212 = vpop.f32.mrb[0].mxu0
    %v213 = vpop.f32.mrb[0].mxu0
    %v214 = vpop.f32.mrb[0].mxu0
    %215 = vdwg.mxu0
    %216 = vrot.lane.b32.xlu0 %v150, 96
    %v217 = vpop.permute.xlu0 %216
    %v219 = vsel %vm169, %v150, 0
    %v222 = vsel %vm169, %v217, 0
    %224 = vmatprep.subr.bf16.mxu0 0
    %225 = vmatpush1.bf16.xpose.msra.mxu0 %v222
    %226 = vmatprep.subr.bf16.mxu0 0
    %227 = vmatpush1.bf16.xpose.msra.mxu0 0
    %228 = vmatprep.subr.bf16.mxu0 0
    %229 = vmatpush1.bf16.xpose.msra.mxu0 0
    %230 = vmatprep.subr.bf16.mxu0 0
    %231 = vmatpush1.bf16.xpose.msra.mxu0 0
    %232 = vmatprep.subr.bf16.mxu0 0
    %233 = vmatpush1.bf16.xpose.msra.mxu0 0
    %234 = vmatprep.subr.bf16.mxu0 0
    %235 = vmatpush1.bf16.xpose.msra.mxu0 0
    %236 = vmatprep.subr.bf16.mxu0 0
    %237 = vmatpush1.bf16.xpose.msra.mxu0 0
    %238 = vmatprep.subr.bf16.mxu0 0
    %239 = vmatpush1.bf16.xpose.msra.mxu0 0
    %240 = vmatprep.subr.bf16.mxu0 0
    %241 = vmatpush1.bf16.xpose.msra.mxu0 0
    %242 = vmatprep.subr.bf16.mxu0 0
    %243 = vmatpush1.bf16.xpose.msra.mxu0 0
    %244 = vmatprep.subr.bf16.mxu0 0
    %245 = vmatpush1.bf16.xpose.msra.mxu0 0
    %246 = vmatprep.subr.bf16.mxu0 0
    %247 = vmatpush1.bf16.xpose.msra.mxu0 0
    %248 = vmatprep.subr.bf16.mxu0 0
    %249 = vmatpush1.bf16.xpose.msra.mxu0 0
    %250 = vmatprep.subr.bf16.mxu0 0
    %251 = vmatpush1.bf16.xpose.msra.mxu0 0
    %252 = vmatprep.subr.bf16.mxu0 0
    %253 = vmatpush1.bf16.xpose.msra.mxu0 0
    %254 = vmatprep.subr.bf16.mxu0 0
    %255 = vmatpush1.bf16.xpose.msra.mxu0 0
    %256 = vmatprep.mubr.bf16.mxu0 0
    %257 = vmatmul.mubr.bf16.gmra.mrb[0].mxu0 %v219
    %v258 = vpop.f32.mrb[0].mxu0
    %v259 = vadd.f32 %v164, %v258
    %v260 = vpop.f32.mrb[0].mxu0
    %v261 = vpop.f32.mrb[0].mxu0
    %v262 = vpop.f32.mrb[0].mxu0
    %263 = vdwg.mxu0
    %v264 = vsel %vm169, %v211, -inf
    %265 = vmax.xlane.f32.xlu0 %v264
    %v266 = vpop.xlane.xlu0 %265
    %v267 = vsel %vm169, %v259, -inf
    %268 = vmax.xlane.f32.xlu0 %v267
    %v269 = vpop.xlane.xlu0 %268
    %v270 = vsub.f32 %v211, %v266
    %v271 = vsub.f32 %v259, %v269
    %v272 = vmul.f32 %v270, 1.442695
    %v273 = vpow.pop %v272
    %v274 = vmul.f32 %v271, 1.442695
    %v275 = vpow.pop %v274
    %v276 = vsel %vm169, %v273, 0.0
    %277 = vadd.xlane.f32.xlu0 %v276
    %v278 = vpop.xlane.xlu0 %277
    %v279 = vsel %vm169, %v275, 0.0
    %280 = vadd.xlane.f32.xlu0 %v279
    %v281 = vpop.xlane.xlu0 %280
    %v282 = vrcp.pop %v278
    %v283 = vrcp.pop %v281
    %v284 = vmul.f32 %v273, %v282
    %v285 = vmul.f32 %v275, %v283
    %v286 = vpack.c.bf16 %v284, %v284
    %v287 = vpack.c.bf16 %v285, %v285
    %288 = vrot.lane.b32.xlu0 %v149, 64
    %v289 = vpop.permute.xlu0 %288
    %v291 = vsel %vm169, %v286, 0
    %vm293 = vcmask 1043456
    %v295 = vsel %vm293, %v289, 0
    %297 = vmatprep.subr.bf16.mxu0 0
    %298 = vmatpush1.bf16.msra.mxu0 %v295
    %299 = vmatprep.subr.bf16.mxu0 0
    %300 = vmatpush1.bf16.msra.mxu0 0
    %301 = vmatprep.subr.bf16.mxu0 0
    %302 = vmatpush1.bf16.msra.mxu0 0
    %303 = vmatprep.subr.bf16.mxu0 0
    %304 = vmatpush1.bf16.msra.mxu0 0
    %305 = vmatprep.subr.bf16.mxu0 0
    %306 = vmatpush1.bf16.msra.mxu0 0
    %307 = vmatprep.subr.bf16.mxu0 0
    %308 = vmatpush1.bf16.msra.mxu0 0
    %309 = vmatprep.subr.bf16.mxu0 0
    %310 = vmatpush1.bf16.msra.mxu0 0
    %311 = vmatprep.subr.bf16.mxu0 0
    %312 = vmatpush1.bf16.msra.mxu0 0
    %313 = vmatprep.subr.bf16.mxu0 0
    %314 = vmatpush1.bf16.msra.mxu0 0
    %315 = vmatprep.subr.bf16.mxu0 0
    %316 = vmatpush1.bf16.msra.mxu0 0
    %317 = vmatprep.subr.bf16.mxu0 0
    %318 = vmatpush1.bf16.msra.mxu0 0
    %319 = vmatprep.subr.bf16.mxu0 0
    %320 = vmatpush1.bf16.msra.mxu0 0
    %321 = vmatprep.subr.bf16.mxu0 0
    %322 = vmatpush1.bf16.msra.mxu0 0
    %323 = vmatprep.subr.bf16.mxu0 0
    %324 = vmatpush1.bf16.msra.mxu0 0
    %325 = vmatprep.subr.bf16.mxu0 0
    %326 = vmatpush1.bf16.msra.mxu0 0
    %327 = vmatprep.subr.bf16.mxu0 0
    %328 = vmatpush1.bf16.msra.mxu0 0
    %329 = vmatprep.mubr.bf16.mxu0 0
    %330 = vmatmul.mubr.bf16.gmra.mrb[0].mxu0 %v291
    %v331 = vpop.f32.mrb[0].mxu0
    %v332 = vadd.f32 0.0, %v331
    %v333 = vpop.f32.mrb[0].mxu0
    %v334 = vpop.f32.mrb[0].mxu0
    %v335 = vpop.f32.mrb[0].mxu0
    %336 = vdwg.mxu0
    %337 = vrot.lane.b32.xlu0 %v150, 64
    %v338 = vpop.permute.xlu0 %337
    %v340 = vsel %vm169, %v287, 0
    %v343 = vsel %vm293, %v338, 0
    %345 = vmatprep.subr.bf16.mxu0 0
    %346 = vmatpush1.bf16.msra.mxu0 %v343
    %347 = vmatprep.subr.bf16.mxu0 0
    %348 = vmatpush1.bf16.msra.mxu0 0
    %349 = vmatprep.subr.bf16.mxu0 0
    %350 = vmatpush1.bf16.msra.mxu0 0
    %351 = vmatprep.subr.bf16.mxu0 0
    %352 = vmatpush1.bf16.msra.mxu0 0
    %353 = vmatprep.subr.bf16.mxu0 0
    %354 = vmatpush1.bf16.msra.mxu0 0
    %355 = vmatprep.subr.bf16.mxu0 0
    %356 = vmatpush1.bf16.msra.mxu0 0
    %357 = vmatprep.subr.bf16.mxu0 0
    %358 = vmatpush1.bf16.msra.mxu0 0
    %359 = vmatprep.subr.bf16.mxu0 0
    %360 = vmatpush1.bf16.msra.mxu0 0
    %361 = vmatprep.subr.bf16.mxu0 0
    %362 = vmatpush1.bf16.msra.mxu0 0
    %363 = vmatprep.subr.bf16.mxu0 0
    %364 = vmatpush1.bf16.msra.mxu0 0
    %365 = vmatprep.subr.bf16.mxu0 0
    %366 = vmatpush1.bf16.msra.mxu0 0
    %367 = vmatprep.subr.bf16.mxu0 0
    %368 = vmatpush1.bf16.msra.mxu0 0
    %369 = vmatprep.subr.bf16.mxu0 0
    %370 = vmatpush1.bf16.msra.mxu0 0
    %371 = vmatprep.subr.bf16.mxu0 0
    %372 = vmatpush1.bf16.msra.mxu0 0
    %373 = vmatprep.subr.bf16.mxu0 0
    %374 = vmatpush1.bf16.msra.mxu0 0
    %375 = vmatprep.subr.bf16.mxu0 0
    %376 = vmatpush1.bf16.msra.mxu0 0
    %377 = vmatprep.mubr.bf16.mxu0 0
    %378 = vmatmul.mubr.bf16.gmra.mrb[0].mxu0 %v340
    %v379 = vpop.f32.mrb[0].mxu0
    %v380 = vadd.f32 0.0, %v379
    %v381 = vpop.f32.mrb[0].mxu0
    %v382 = vpop.f32.mrb[0].mxu0
    %v383 = vpop.f32.mrb[0].mxu0
    %384 = vdwg.mxu0
    %v385 = vpack.c.bf16 %v332, %v332
    %v386 = vpack.c.bf16 %v380, %v380
    %387 = vrot.lane.b32.xlu0 %v149, 120
    %v388 = vpop.permute.xlu0 %387
    %389 = vrot.lane.b32.xlu0 %v149, 88
    %v390 = vpop.permute.xlu0 %389
    %v392 = vsel %vm169, %v388, 0
    %v395 = vsel %vm169, %v390, 0
    %397 = vmatprep.subr.bf16.mxu0 0
    %398 = vmatpush1.bf16.xpose.msra.mxu0 %v395
    %399 = vmatprep.subr.bf16.mxu0 0
    %400 = vmatpush1.bf16.xpose.msra.mxu0 0
    %401 = vmatprep.subr.bf16.mxu0 0
    %402 = vmatpush1.bf16.xpose.msra.mxu0 0
    %403 = vmatprep.subr.bf16.mxu0 0
    %404 = vmatpush1.bf16.xpose.msra.mxu0 0
    %405 = vmatprep.subr.bf16.mxu0 0
    %406 = vmatpush1.bf16.xpose.msra.mxu0 0
    %407 = vmatprep.subr.bf16.mxu0 0
    %408 = vmatpush1.bf16.xpose.msra.mxu0 0
    %409 = vmatprep.subr.bf16.mxu0 0
    %410 = vmatpush1.bf16.xpose.msra.mxu0 0
    %411 = vmatprep.subr.bf16.mxu0 0
    %412 = vmatpush1.bf16.xpose.msra.mxu0 0
    %413 = vmatprep.subr.bf16.mxu0 0
    %414 = vmatpush1.bf16.xpose.msra.mxu0 0
    %415 = vmatprep.subr.bf16.mxu0 0
    %416 = vmatpush1.bf16.xpose.msra.mxu0 0
    %417 = vmatprep.subr.bf16.mxu0 0
    %418 = vmatpush1.bf16.xpose.msra.mxu0 0
    %419 = vmatprep.subr.bf16.mxu0 0
    %420 = vmatpush1.bf16.xpose.msra.mxu0 0
    %421 = vmatprep.subr.bf16.mxu0 0
    %422 = vmatpush1.bf16.xpose.msra.mxu0 0
    %423 = vmatprep.subr.bf16.mxu0 0
    %424 = vmatpush1.bf16.xpose.msra.mxu0 0
    %425 = vmatprep.subr.bf16.mxu0 0
    %426 = vmatpush1.bf16.xpose.msra.mxu0 0
    %427 = vmatprep.subr.bf16.mxu0 0
    %428 = vmatpush1.bf16.xpose.msra.mxu0 0
    %429 = vmatprep.mubr.bf16.mxu0 0
    %430 = vmatmul.mubr.bf16.gmra.mrb[0].mxu0 %v392
    %v431 = vpop.f32.mrb[0].mxu0
    %v432 = vadd.f32 %v160, %v431
    %v433 = vpop.f32.mrb[0].mxu0
    %v434 = vpop.f32.mrb[0].mxu0
    %v435 = vpop.f32.mrb[0].mxu0
    %436 = vdwg.mxu0
    %437 = vrot.lane.b32.xlu0 %v150, 120
    %v438 = vpop.permute.xlu0 %437
    %439 = vrot.lane.b32.xlu0 %v150, 88
    %v440 = vpop.permute.xlu0 %439
    %v442 = vsel %vm169, %v438, 0
    %v445 = vsel %vm169, %v440, 0
    %447 = vmatprep.subr.bf16.mxu0 0
    %448 = vmatpush1.bf16.xpose.msra.mxu0 %v445
    %449 = vmatprep.subr.bf16.mxu0 0
    %450 = vmatpush1.bf16.xpose.msra.mxu0 0
    %451 = vmatprep.subr.bf16.mxu0 0
    %452 = vmatpush1.bf16.xpose.msra.mxu0 0
    %453 = vmatprep.subr.bf16.mxu0 0
    %454 = vmatpush1.bf16.xpose.msra.mxu0 0
    %455 = vmatprep.subr.bf16.mxu0 0
    %456 = vmatpush1.bf16.xpose.msra.mxu0 0
    %457 = vmatprep.subr.bf16.mxu0 0
    %458 = vmatpush1.bf16.xpose.msra.mxu0 0
    %459 = vmatprep.subr.bf16.mxu0 0
    %460 = vmatpush1.bf16.xpose.msra.mxu0 0
    %461 = vmatprep.subr.bf16.mxu0 0
    %462 = vmatpush1.bf16.xpose.msra.mxu0 0
    %463 = vmatprep.subr.bf16.mxu0 0
    %464 = vmatpush1.bf16.xpose.msra.mxu0 0
    %465 = vmatprep.subr.bf16.mxu0 0
    %466 = vmatpush1.bf16.xpose.msra.mxu0 0
    %467 = vmatprep.subr.bf16.mxu0 0
    %468 = vmatpush1.bf16.xpose.msra.mxu0 0
    %469 = vmatprep.subr.bf16.mxu0 0
    %470 = vmatpush1.bf16.xpose.msra.mxu0 0
    %471 = vmatprep.subr.bf16.mxu0 0
    %472 = vmatpush1.bf16.xpose.msra.mxu0 0
    %473 = vmatprep.subr.bf16.mxu0 0
    %474 = vmatpush1.bf16.xpose.msra.mxu0 0
    %475 = vmatprep.subr.bf16.mxu0 0
    %476 = vmatpush1.bf16.xpose.msra.mxu0 0
    %477 = vmatprep.subr.bf16.mxu0 0
    %478 = vmatpush1.bf16.xpose.msra.mxu0 0
    %479 = vmatprep.mubr.bf16.mxu0 0
    %480 = vmatmul.mubr.bf16.gmra.mrb[0].mxu0 %v442
    %v481 = vpop.f32.mrb[0].mxu0
    %v482 = vadd.f32 %v164, %v481
    %v483 = vpop.f32.mrb[0].mxu0
    %v484 = vpop.f32.mrb[0].mxu0
    %v485 = vpop.f32.mrb[0].mxu0
    %486 = vdwg.mxu0
    %v487 = vsel %vm169, %v432, -inf
    %488 = vmax.xlane.f32.xlu0 %v487
    %v489 = vpop.xlane.xlu0 %488
    %v490 = vsel %vm169, %v482, -inf
    %491 = vmax.xlane.f32.xlu0 %v490
    %v492 = vpop.xlane.xlu0 %491
    %v493 = vsub.f32 %v432, %v489
    %v494 = vsub.f32 %v482, %v492
    %v495 = vmul.f32 %v493, 1.442695
    %v496 = vpow.pop %v495
    %v497 = vmul.f32 %v494, 1.442695
    %v498 = vpow.pop %v497
    %v499 = vsel %vm169, %v496, 0.0
    %500 = vadd.xlane.f32.xlu0 %v499
    %v501 = vpop.xlane.xlu0 %500
    %v502 = vsel %vm169, %v498, 0.0
    %503 = vadd.xlane.f32.xlu0 %v502
    %v504 = vpop.xlane.xlu0 %503
    %v505 = vrcp.pop %v501
    %v506 = vrcp.pop %v504
    %v507 = vmul.f32 %v496, %v505
    %v508 = vmul.f32 %v498, %v506
    %v509 = vpack.c.bf16 %v507, %v507
    %v510 = vpack.c.bf16 %v508, %v508
    %511 = vrot.lane.b32.xlu0 %v149, 56
    %v512 = vpop.permute.xlu0 %511
    %v514 = vsel %vm169, %v509, 0
    %v517 = vsel %vm293, %v512, 0
    %519 = vmatprep.subr.bf16.mxu0 0
    %520 = vmatpush1.bf16.msra.mxu0 %v517
    %521 = vmatprep.subr.bf16.mxu0 0
    %522 = vmatpush1.bf16.msra.mxu0 0
    %523 = vmatprep.subr.bf16.mxu0 0
    %524 = vmatpush1.bf16.msra.mxu0 0
    %525 = vmatprep.subr.bf16.mxu0 0
    %526 = vmatpush1.bf16.msra.mxu0 0
    %527 = vmatprep.subr.bf16.mxu0 0
    %528 = vmatpush1.bf16.msra.mxu0 0
    %529 = vmatprep.subr.bf16.mxu0 0
    %530 = vmatpush1.bf16.msra.mxu0 0
    %531 = vmatprep.subr.bf16.mxu0 0
    %532 = vmatpush1.bf16.msra.mxu0 0
    %533 = vmatprep.subr.bf16.mxu0 0
    %534 = vmatpush1.bf16.msra.mxu0 0
    %535 = vmatprep.subr.bf16.mxu0 0
    %536 = vmatpush1.bf16.msra.mxu0 0
    %537 = vmatprep.subr.bf16.mxu0 0
    %538 = vmatpush1.bf16.msra.mxu0 0
    %539 = vmatprep.subr.bf16.mxu0 0
    %540 = vmatpush1.bf16.msra.mxu0 0
    %541 = vmatprep.subr.bf16.mxu0 0
    %542 = vmatpush1.bf16.msra.mxu0 0
    %543 = vmatprep.subr.bf16.mxu0 0
    %544 = vmatpush1.bf16.msra.mxu0 0
    %545 = vmatprep.subr.bf16.mxu0 0
    %546 = vmatpush1.bf16.msra.mxu0 0
    %547 = vmatprep.subr.bf16.mxu0 0
    %548 = vmatpush1.bf16.msra.mxu0 0
    %549 = vmatprep.subr.bf16.mxu0 0
    %550 = vmatpush1.bf16.msra.mxu0 0
    %551 = vmatprep.mubr.bf16.mxu0 0
    %552 = vmatmul.mubr.bf16.gmra.mrb[0].mxu0 %v514
    %v553 = vpop.f32.mrb[0].mxu0
    %v554 = vadd.f32 0.0, %v553
    %v555 = vpop.f32.mrb[0].mxu0
    %v556 = vpop.f32.mrb[0].mxu0
    %v557 = vpop.f32.mrb[0].mxu0
    %558 = vdwg.mxu0
    %559 = vrot.lane.b32.xlu0 %v150, 56
    %v560 = vpop.permute.xlu0 %559
    %v562 = vsel %vm169, %v510, 0
    %v565 = vsel %vm293, %v560, 0
    %567 = vmatprep.subr.bf16.mxu0 0
    %568 = vmatpush1.bf16.msra.mxu0 %v565
    %569 = vmatprep.subr.bf16.mxu0 0
    %570 = vmatpush1.bf16.msra.mxu0 0
    %571 = vmatprep.subr.bf16.mxu0 0
    %572 = vmatpush1.bf16.msra.mxu0 0
    %573 = vmatprep.subr.bf16.mxu0 0
    %574 = vmatpush1.bf16.msra.mxu0 0
    %575 = vmatprep.subr.bf16.mxu0 0
    %576 = vmatpush1.bf16.msra.mxu0 0
    %577 = vmatprep.subr.bf16.mxu0 0
    %578 = vmatpush1.bf16.msra.mxu0 0
    %579 = vmatprep.subr.bf16.mxu0 0
    %580 = vmatpush1.bf16.msra.mxu0 0
    %581 = vmatprep.subr.bf16.mxu0 0
    %582 = vmatpush1.bf16.msra.mxu0 0
    %583 = vmatprep.subr.bf16.mxu0 0
    %584 = vmatpush1.bf16.msra.mxu0 0
    %585 = vmatprep.subr.bf16.mxu0 0
    %586 = vmatpush1.bf16.msra.mxu0 0
    %587 = vmatprep.subr.bf16.mxu0 0
    %588 = vmatpush1.bf16.msra.mxu0 0
    %589 = vmatprep.subr.bf16.mxu0 0
    %590 = vmatpush1.bf16.msra.mxu0 0
    %591 = vmatprep.subr.bf16.mxu0 0
    %592 = vmatpush1.bf16.msra.mxu0 0
    %593 = vmatprep.subr.bf16.mxu0 0
    %594 = vmatpush1.bf16.msra.mxu0 0
    %595 = vmatprep.subr.bf16.mxu0 0
    %596 = vmatpush1.bf16.msra.mxu0 0
    %597 = vmatprep.subr.bf16.mxu0 0
    %598 = vmatpush1.bf16.msra.mxu0 0
    %599 = vmatprep.mubr.bf16.mxu0 0
    %600 = vmatmul.mubr.bf16.gmra.mrb[0].mxu0 %v562
    %v601 = vpop.f32.mrb[0].mxu0
    %v602 = vadd.f32 0.0, %v601
    %v603 = vpop.f32.mrb[0].mxu0
    %v604 = vpop.f32.mrb[0].mxu0
    %v605 = vpop.f32.mrb[0].mxu0
    %606 = vdwg.mxu0
    %v607 = vpack.c.bf16 %v554, %v554
    %v608 = vpack.c.bf16 %v602, %v602
    %v611 = vunpack.c.l.b16 %v607
    %v612 = vunpack.c.l.b16 %v608
    %v613 = vpack.c.b16 %v612, %v611
    %v615 = vsel %vm169, %v613, 0
    %v618 = vsel %vm293, %v152, 0
    %620 = vmatprep.subr.bf16.mxu0 0
    %621 = vmatpush1.bf16.msra.mxu0 %v618
    %622 = vmatprep.subr.bf16.mxu0 0
    %623 = vmatpush1.bf16.msra.mxu0 0
    %624 = vmatprep.subr.bf16.mxu0 0
    %625 = vmatpush1.bf16.msra.mxu0 0
    %626 = vmatprep.subr.bf16.mxu0 0
    %627 = vmatpush1.bf16.msra.mxu0 0
    %628 = vmatprep.subr.bf16.mxu0 0
    %629 = vmatpush1.bf16.msra.mxu0 0
    %630 = vmatprep.subr.bf16.mxu0 0
    %631 = vmatpush1.bf16.msra.mxu0 0
    %632 = vmatprep.subr.bf16.mxu0 0
    %633 = vmatpush1.bf16.msra.mxu0 0
    %634 = vmatprep.subr.bf16.mxu0 0
    %635 = vmatpush1.bf16.msra.mxu0 0
    %636 = vmatprep.subr.bf16.mxu0 0
    %637 = vmatpush1.bf16.msra.mxu0 0
    %638 = vmatprep.subr.bf16.mxu0 0
    %639 = vmatpush1.bf16.msra.mxu0 0
    %640 = vmatprep.subr.bf16.mxu0 0
    %641 = vmatpush1.bf16.msra.mxu0 0
    %642 = vmatprep.subr.bf16.mxu0 0
    %643 = vmatpush1.bf16.msra.mxu0 0
    %644 = vmatprep.subr.bf16.mxu0 0
    %645 = vmatpush1.bf16.msra.mxu0 0
    %646 = vmatprep.subr.bf16.mxu0 0
    %647 = vmatpush1.bf16.msra.mxu0 0
    %648 = vmatprep.subr.bf16.mxu0 0
    %649 = vmatpush1.bf16.msra.mxu0 0
    %650 = vmatprep.subr.bf16.mxu0 0
    %651 = vmatpush1.bf16.msra.mxu0 0
    %652 = vmatprep.mubr.bf16.mxu0 0
    %653 = vmatmul.mubr.bf16.gmra.mrb[0].mxu0 %v615
    %v654 = vpop.f32.mrb[0].mxu0
    %v655 = vadd.f32 0.0, %v654
    %v656 = vpop.f32.mrb[0].mxu0
    %v657 = vpop.f32.mrb[0].mxu0
    %v658 = vadd.f32 0.0, %v657
    %v659 = vpop.f32.mrb[0].mxu0
    %660 = vdwg.mxu0
    %v663 = vunpack.c.l.b16 %v385
    %v664 = vunpack.c.l.b16 %v386
    %v665 = vpack.c.b16 %v664, %v663
    %v667 = vsel %vm169, %v665, 0
    %v670 = vsel %vm293, %v151, 0
    %672 = vmatprep.subr.bf16.mxu0 0
    %673 = vmatpush1.bf16.msra.mxu0 %v670
    %674 = vmatprep.subr.bf16.mxu0 0
    %675 = vmatpush1.bf16.msra.mxu0 0
    %676 = vmatprep.subr.bf16.mxu0 0
    %677 = vmatpush1.bf16.msra.mxu0 0
    %678 = vmatprep.subr.bf16.mxu0 0
    %679 = vmatpush1.bf16.msra.mxu0 0
    %680 = vmatprep.subr.bf16.mxu0 0
    %681 = vmatpush1.bf16.msra.mxu0 0
    %682 = vmatprep.subr.bf16.mxu0 0
    %683 = vmatpush1.bf16.msra.mxu0 0
    %684 = vmatprep.subr.bf16.mxu0 0
    %685 = vmatpush1.bf16.msra.mxu0 0
    %686 = vmatprep.subr.bf16.mxu0 0
    %687 = vmatpush1.bf16.msra.mxu0 0
    %688 = vmatprep.subr.bf16.mxu0 0
    %689 = vmatpush1.bf16.msra.mxu0 0
    %690 = vmatprep.subr.bf16.mxu0 0
    %691 = vmatpush1.bf16.msra.mxu0 0
    %692 = vmatprep.subr.bf16.mxu0 0
    %693 = vmatpush1.bf16.msra.mxu0 0
    %694 = vmatprep.subr.bf16.mxu0 0
    %695 = vmatpush1.bf16.msra.mxu0 0
    %696 = vmatprep.subr.bf16.mxu0 0
    %697 = vmatpush1.bf16.msra.mxu0 0
    %698 = vmatprep.subr.bf16.mxu0 0
    %699 = vmatpush1.bf16.msra.mxu0 0
    %700 = vmatprep.subr.bf16.mxu0 0
    %701 = vmatpush1.bf16.msra.mxu0 0
    %702 = vmatprep.subr.bf16.mxu0 0
    %703 = vmatpush1.bf16.msra.mxu0 0
    %704 = vmatprep.mubr.bf16.mxu0 0
    %705 = vmatmul.mubr.bf16.gmra.mrb[0].mxu0 %v667
    %v706 = vpop.f32.mrb[0].mxu0
    %v707 = vadd.f32 %v655, %v706
    %v708 = vpop.f32.mrb[0].mxu0
    %v709 = vpop.f32.mrb[0].mxu0
    %v710 = vadd.f32 %v658, %v709
    %v711 = vpop.f32.mrb[0].mxu0
    %712 = vdwg.mxu0
    %713 = vrot.lane.b32.xlu0 %v149, 112
    %v714 = vpop.permute.xlu0 %713
    %715 = vrot.lane.b32.xlu0 %v149, 80
    %v716 = vpop.permute.xlu0 %715
    %v718 = vsel %vm169, %v714, 0
    %v721 = vsel %vm169, %v716, 0
    %723 = vmatprep.subr.bf16.mxu0 0
    %724 = vmatpush1.bf16.xpose.msra.mxu0 %v721
    %725 = vmatprep.subr.bf16.mxu0 0
    %726 = vmatpush1.bf16.xpose.msra.mxu0 0
    %727 = vmatprep.subr.bf16.mxu0 0
    %728 = vmatpush1.bf16.xpose.msra.mxu0 0
    %729 = vmatprep.subr.bf16.mxu0 0
    %730 = vmatpush1.bf16.xpose.msra.mxu0 0
    %731 = vmatprep.subr.bf16.mxu0 0
    %732 = vmatpush1.bf16.xpose.msra.mxu0 0
    %733 = vmatprep.subr.bf16.mxu0 0
    %734 = vmatpush1.bf16.xpose.msra.mxu0 0
    %735 = vmatprep.subr.bf16.mxu0 0
    %736 = vmatpush1.bf16.xpose.msra.mxu0 0
    %737 = vmatprep.subr.bf16.mxu0 0
    %738 = vmatpush1.bf16.xpose.msra.mxu0 0
    %739 = vmatprep.subr.bf16.mxu0 0
    %740 = vmatpush1.bf16.xpose.msra.mxu0 0
    %741 = vmatprep.subr.bf16.mxu0 0
    %742 = vmatpush1.bf16.xpose.msra.mxu0 0
    %743 = vmatprep.subr.bf16.mxu0 0
    %744 = vmatpush1.bf16.xpose.msra.mxu0 0
    %745 = vmatprep.subr.bf16.mxu0 0
    %746 = vmatpush1.bf16.xpose.msra.mxu0 0
    %747 = vmatprep.subr.bf16.mxu0 0
    %748 = vmatpush1.bf16.xpose.msra.mxu0 0
    %749 = vmatprep.subr.bf16.mxu0 0
    %750 = vmatpush1.bf16.xpose.msra.mxu0 0
    %751 = vmatprep.subr.bf16.mxu0 0
    %752 = vmatpush1.bf16.xpose.msra.mxu0 0
    %753 = vmatprep.subr.bf16.mxu0 0
    %754 = vmatpush1.bf16.xpose.msra.mxu0 0
    %755 = vmatprep.mubr.bf16.mxu0 0
    %756 = vmatmul.mubr.bf16.gmra.mrb[0].mxu0 %v718
    %v757 = vpop.f32.mrb[0].mxu0
    %v758 = vadd.f32 %v160, %v757
    %v759 = vpop.f32.mrb[0].mxu0
    %v760 = vpop.f32.mrb[0].mxu0
    %v761 = vpop.f32.mrb[0].mxu0
    %762 = vdwg.mxu0
    %763 = vrot.lane.b32.xlu0 %v150, 112
    %v764 = vpop.permute.xlu0 %763
    %765 = vrot.lane.b32.xlu0 %v150, 80
    %v766 = vpop.permute.xlu0 %765
    %v768 = vsel %vm169, %v764, 0
    %v771 = vsel %vm169, %v766, 0
    %773 = vmatprep.subr.bf16.mxu0 0
    %774 = vmatpush1.bf16.xpose.msra.mxu0 %v771
    %775 = vmatprep.subr.bf16.mxu0 0
    %776 = vmatpush1.bf16.xpose.msra.mxu0 0
    %777 = vmatprep.subr.bf16.mxu0 0
    %778 = vmatpush1.bf16.xpose.msra.mxu0 0
    %779 = vmatprep.subr.bf16.mxu0 0
    %780 = vmatpush1.bf16.xpose.msra.mxu0 0
    %781 = vmatprep.subr.bf16.mxu0 0
    %782 = vmatpush1.bf16.xpose.msra.mxu0 0
    %783 = vmatprep.subr.bf16.mxu0 0
    %784 = vmatpush1.bf16.xpose.msra.mxu0 0
    %785 = vmatprep.subr.bf16.mxu0 0
    %786 = vmatpush1.bf16.xpose.msra.mxu0 0
    %787 = vmatprep.subr.bf16.mxu0 0
    %788 = vmatpush1.bf16.xpose.msra.mxu0 0
    %789 = vmatprep.subr.bf16.mxu0 0
    %790 = vmatpush1.bf16.xpose.msra.mxu0 0
    %791 = vmatprep.subr.bf16.mxu0 0
    %792 = vmatpush1.bf16.xpose.msra.mxu0 0
    %793 = vmatprep.subr.bf16.mxu0 0
    %794 = vmatpush1.bf16.xpose.msra.mxu0 0
    %795 = vmatprep.subr.bf16.mxu0 0
    %796 = vmatpush1.bf16.xpose.msra.mxu0 0
    %797 = vmatprep.subr.bf16.mxu0 0
    %798 = vmatpush1.bf16.xpose.msra.mxu0 0
    %799 = vmatprep.subr.bf16.mxu0 0
    %800 = vmatpush1.bf16.xpose.msra.mxu0 0
    %801 = vmatprep.subr.bf16.mxu0 0
    %802 = vmatpush1.bf16.xpose.msra.mxu0 0
    %803 = vmatprep.subr.bf16.mxu0 0
    %804 = vmatpush1.bf16.xpose.msra.mxu0 0
    %805 = vmatprep.mubr.bf16.mxu0 0
    %806 = vmatmul.mubr.bf16.gmra.mrb[0].mxu0 %v768
    %v807 = vpop.f32.mrb[0].mxu0
    %v808 = vadd.f32 %v164, %v807
    %v809 = vpop.f32.mrb[0].mxu0
    %v810 = vpop.f32.mrb[0].mxu0
    %v811 = vpop.f32.mrb[0].mxu0
    %812 = vdwg.mxu0
    %v813 = vsel %vm169, %v758, -inf
    %814 = vmax.xlane.f32.xlu0 %v813
    %v815 = vpop.xlane.xlu0 %814
    %v816 = vsel %vm169, %v808, -inf
    %817 = vmax.xlane.f32.xlu0 %v816
    %v818 = vpop.xlane.xlu0 %817
    %v819 = vsub.f32 %v758, %v815
    %v820 = vsub.f32 %v808, %v818
    %v821 = vmul.f32 %v819, 1.442695
    %v822 = vpow.pop %v821
    %v823 = vmul.f32 %v820, 1.442695
    %v824 = vpow.pop %v823
    %v825 = vsel %vm169, %v822, 0.0
    %826 = vadd.xlane.f32.xlu0 %v825
    %v827 = vpop.xlane.xlu0 %826
    %v828 = vsel %vm169, %v824, 0.0
    %829 = vadd.xlane.f32.xlu0 %v828
    %v830 = vpop.xlane.xlu0 %829
    %v831 = vrcp.pop %v827
    %v832 = vrcp.pop %v830
    %v833 = vmul.f32 %v822, %v831
    %v834 = vmul.f32 %v824, %v832
    %v835 = vpack.c.bf16 %v833, %v833
    %v836 = vpack.c.bf16 %v834, %v834
    %837 = vrot.lane.b32.xlu0 %v149, 48
    %v838 = vpop.permute.xlu0 %837
    %v840 = vsel %vm169, %v835, 0
    %v843 = vsel %vm293, %v838, 0
    %845 = vmatprep.subr.bf16.mxu0 0
    %846 = vmatpush1.bf16.msra.mxu0 %v843
    %847 = vmatprep.subr.bf16.mxu0 0
    %848 = vmatpush1.bf16.msra.mxu0 0
    %849 = vmatprep.subr.bf16.mxu0 0
    %850 = vmatpush1.bf16.msra.mxu0 0
    %851 = vmatprep.subr.bf16.mxu0 0
    %852 = vmatpush1.bf16.msra.mxu0 0
    %853 = vmatprep.subr.bf16.mxu0 0
    %854 = vmatpush1.bf16.msra.mxu0 0
    %855 = vmatprep.subr.bf16.mxu0 0
    %856 = vmatpush1.bf16.msra.mxu0 0
    %857 = vmatprep.subr.bf16.mxu0 0
    %858 = vmatpush1.bf16.msra.mxu0 0
    %859 = vmatprep.subr.bf16.mxu0 0
    %860 = vmatpush1.bf16.msra.mxu0 0
    %861 = vmatprep.subr.bf16.mxu0 0
    %862 = vmatpush1.bf16.msra.mxu0 0
    %863 = vmatprep.subr.bf16.mxu0 0
    %864 = vmatpush1.bf16.msra.mxu0 0
    %865 = vmatprep.subr.bf16.mxu0 0
    %866 = vmatpush1.bf16.msra.mxu0 0
    %867 = vmatprep.subr.bf16.mxu0 0
    %868 = vmatpush1.bf16.msra.mxu0 0
    %869 = vmatprep.subr.bf16.mxu0 0
    %870 = vmatpush1.bf16.msra.mxu0 0
    %871 = vmatprep.subr.bf16.mxu0 0
    %872 = vmatpush1.bf16.msra.mxu0 0
    %873 = vmatprep.subr.bf16.mxu0 0
    %874 = vmatpush1.bf16.msra.mxu0 0
    %875 = vmatprep.subr.bf16.mxu0 0
    %876 = vmatpush1.bf16.msra.mxu0 0
    %877 = vmatprep.mubr.bf16.mxu0 0
    %878 = vmatmul.mubr.bf16.gmra.mrb[0].mxu0 %v840
    %v879 = vpop.f32.mrb[0].mxu0
    %v880 = vadd.f32 0.0, %v879
    %v881 = vpop.f32.mrb[0].mxu0
    %v882 = vpop.f32.mrb[0].mxu0
    %v883 = vpop.f32.mrb[0].mxu0
    %884 = vdwg.mxu0
    %885 = vrot.lane.b32.xlu0 %v150, 48
    %v886 = vpop.permute.xlu0 %885
    %v888 = vsel %vm169, %v836, 0
    %v891 = vsel %vm293, %v886, 0
    %893 = vmatprep.subr.bf16.mxu0 0
    %894 = vmatpush1.bf16.msra.mxu0 %v891
    %895 = vmatprep.subr.bf16.mxu0 0
    %896 = vmatpush1.bf16.msra.mxu0 0
    %897 = vmatprep.subr.bf16.mxu0 0
    %898 = vmatpush1.bf16.msra.mxu0 0
    %899 = vmatprep.subr.bf16.mxu0 0
    %900 = vmatpush1.bf16.msra.mxu0 0
    %901 = vmatprep.subr.bf16.mxu0 0
    %902 = vmatpush1.bf16.msra.mxu0 0
    %903 = vmatprep.subr.bf16.mxu0 0
    %904 = vmatpush1.bf16.msra.mxu0 0
    %905 = vmatprep.subr.bf16.mxu0 0
    %906 = vmatpush1.bf16.msra.mxu0 0
    %907 = vmatprep.subr.bf16.mxu0 0
    %908 = vmatpush1.bf16.msra.mxu0 0
    %909 = vmatprep.subr.bf16.mxu0 0
    %910 = vmatpush1.bf16.msra.mxu0 0
    %911 = vmatprep.subr.bf16.mxu0 0
    %912 = vmatpush1.bf16.msra.mxu0 0
    %913 = vmatprep.subr.bf16.mxu0 0
    %914 = vmatpush1.bf16.msra.mxu0 0
    %915 = vmatprep.subr.bf16.mxu0 0
    %916 = vmatpush1.bf16.msra.mxu0 0
    %917 = vmatprep.subr.bf16.mxu0 0
    %918 = vmatpush1.bf16.msra.mxu0 0
    %919 = vmatprep.subr.bf16.mxu0 0
    %920 = vmatpush1.bf16.msra.mxu0 0
    %921 = vmatprep.subr.bf16.mxu0 0
    %922 = vmatpush1.bf16.msra.mxu0 0
    %923 = vmatprep.subr.bf16.mxu0 0
    %924 = vmatpush1.bf16.msra.mxu0 0
    %925 = vmatprep.mubr.bf16.mxu0 0
    %926 = vmatmul.mubr.bf16.gmra.mrb[0].mxu0 %v888
    %v927 = vpop.f32.mrb[0].mxu0
    %v928 = vadd.f32 0.0, %v927
    %v929 = vpop.f32.mrb[0].mxu0
    %v930 = vpop.f32.mrb[0].mxu0
    %v931 = vpop.f32.mrb[0].mxu0
    %932 = vdwg.mxu0
    %v933 = vpack.c.bf16 %v880, %v880
    %v934 = vpack.c.bf16 %v928, %v928
    %v937 = vunpack.c.l.b16 %v933
    %v938 = vunpack.c.l.b16 %v934
    %v939 = vpack.c.b16 %v938, %v937
    %v941 = vsel %vm169, %v939, 0
    %v944 = vsel %vm293, %v153, 0
    %946 = vmatprep.subr.bf16.mxu0 0
    %947 = vmatpush1.bf16.msra.mxu0 %v944
    %948 = vmatprep.subr.bf16.mxu0 0
    %949 = vmatpush1.bf16.msra.mxu0 0
    %950 = vmatprep.subr.bf16.mxu0 0
    %951 = vmatpush1.bf16.msra.mxu0 0
    %952 = vmatprep.subr.bf16.mxu0 0
    %953 = vmatpush1.bf16.msra.mxu0 0
    %954 = vmatprep.subr.bf16.mxu0 0
    %955 = vmatpush1.bf16.msra.mxu0 0
    %956 = vmatprep.subr.bf16.mxu0 0
    %957 = vmatpush1.bf16.msra.mxu0 0
    %958 = vmatprep.subr.bf16.mxu0 0
    %959 = vmatpush1.bf16.msra.mxu0 0
    %960 = vmatprep.subr.bf16.mxu0 0
    %961 = vmatpush1.bf16.msra.mxu0 0
    %962 = vmatprep.subr.bf16.mxu0 0
    %963 = vmatpush1.bf16.msra.mxu0 0
    %964 = vmatprep.subr.bf16.mxu0 0
    %965 = vmatpush1.bf16.msra.mxu0 0
    %966 = vmatprep.subr.bf16.mxu0 0
    %967 = vmatpush1.bf16.msra.mxu0 0
    %968 = vmatprep.subr.bf16.mxu0 0
    %969 = vmatpush1.bf16.msra.mxu0 0
    %970 = vmatprep.subr.bf16.mxu0 0
    %971 = vmatpush1.bf16.msra.mxu0 0
    %972 = vmatprep.subr.bf16.mxu0 0
    %973 = vmatpush1.bf16.msra.mxu0 0
    %974 = vmatprep.subr.bf16.mxu0 0
    %975 = vmatpush1.bf16.msra.mxu0 0
    %976 = vmatprep.subr.bf16.mxu0 0
    %977 = vmatpush1.bf16.msra.mxu0 0
    %978 = vmatprep.mubr.bf16.mxu0 0
    %979 = vmatmul.mubr.bf16.gmra.mrb[0].mxu0 %v941
    %v980 = vpop.f32.mrb[0].mxu0
    %v981 = vadd.f32 0.0, %v980
    %v982 = vpop.f32.mrb[0].mxu0
    %v983 = vpop.f32.mrb[0].mxu0
    %v984 = vadd.f32 0.0, %v983
    %v985 = vpop.f32.mrb[0].mxu0
    %986 = vdwg.mxu0
    %v987 = vadd.f32 %v707, %v981
    %v988 = vadd.f32 %v710, %v984
    %989 = vrot.lane.b32.xlu0 %v149, 104
    %v990 = vpop.permute.xlu0 %989
    %991 = vrot.lane.b32.xlu0 %v149, 72
    %v992 = vpop.permute.xlu0 %991
    %v994 = vsel %vm169, %v990, 0
    %v997 = vsel %vm169, %v992, 0
    %999 = vmatprep.subr.bf16.mxu0 0
    %1000 = vmatpush1.bf16.xpose.msra.mxu0 %v997
    %1001 = vmatprep.subr.bf16.mxu0 0
    %1002 = vmatpush1.bf16.xpose.msra.mxu0 0
    %1003 = vmatprep.subr.bf16.mxu0 0
    %1004 = vmatpush1.bf16.xpose.msra.mxu0 0
    %1005 = vmatprep.subr.bf16.mxu0 0
    %1006 = vmatpush1.bf16.xpose.msra.mxu0 0
    %1007 = vmatprep.subr.bf16.mxu0 0
    %1008 = vmatpush1.bf16.xpose.msra.mxu0 0
    %1009 = vmatprep.subr.bf16.mxu0 0
    %1010 = vmatpush1.bf16.xpose.msra.mxu0 0
    %1011 = vmatprep.subr.bf16.mxu0 0
    %1012 = vmatpush1.bf16.xpose.msra.mxu0 0
    %1013 = vmatprep.subr.bf16.mxu0 0
    %1014 = vmatpush1.bf16.xpose.msra.mxu0 0
    %1015 = vmatprep.subr.bf16.mxu0 0
    %1016 = vmatpush1.bf16.xpose.msra.mxu0 0
    %1017 = vmatprep.subr.bf16.mxu0 0
    %1018 = vmatpush1.bf16.xpose.msra.mxu0 0
    %1019 = vmatprep.subr.bf16.mxu0 0
    %1020 = vmatpush1.bf16.xpose.msra.mxu0 0
    %1021 = vmatprep.subr.bf16.mxu0 0
    %1022 = vmatpush1.bf16.xpose.msra.mxu0 0
    %1023 = vmatprep.subr.bf16.mxu0 0
    %1024 = vmatpush1.bf16.xpose.msra.mxu0 0
    %1025 = vmatprep.subr.bf16.mxu0 0
    %1026 = vmatpush1.bf16.xpose.msra.mxu0 0
    %1027 = vmatprep.subr.bf16.mxu0 0
    %1028 = vmatpush1.bf16.xpose.msra.mxu0 0
    %1029 = vmatprep.subr.bf16.mxu0 0
    %1030 = vmatpush1.bf16.xpose.msra.mxu0 0
    %1031 = vmatprep.mubr.bf16.mxu0 0
    %1032 = vmatmul.mubr.bf16.gmra.mrb[0].mxu0 %v994
    %v1033 = vpop.f32.mrb[0].mxu0
    %v1034 = vadd.f32 %v160, %v1033
    %v1035 = vpop.f32.mrb[0].mxu0
    %v1036 = vpop.f32.mrb[0].mxu0
    %v1037 = vpop.f32.mrb[0].mxu0
    %1038 = vdwg.mxu0
    %1039 = vrot.lane.b32.xlu0 %v150, 104
    %v1040 = vpop.permute.xlu0 %1039
    %1041 = vrot.lane.b32.xlu0 %v150, 72
    %v1042 = vpop.permute.xlu0 %1041
    %v1044 = vsel %vm169, %v1040, 0
    %v1047 = vsel %vm169, %v1042, 0
    %1049 = vmatprep.subr.bf16.mxu0 0
    %1050 = vmatpush1.bf16.xpose.msra.mxu0 %v1047
    %1051 = vmatprep.subr.bf16.mxu0 0
    %1052 = vmatpush1.bf16.xpose.msra.mxu0 0
    %1053 = vmatprep.subr.bf16.mxu0 0
    %1054 = vmatpush1.bf16.xpose.msra.mxu0 0
    %1055 = vmatprep.subr.bf16.mxu0 0
    %1056 = vmatpush1.bf16.xpose.msra.mxu0 0
    %1057 = vmatprep.subr.bf16.mxu0 0
    %1058 = vmatpush1.bf16.xpose.msra.mxu0 0
    %1059 = vmatprep.subr.bf16.mxu0 0
    %1060 = vmatpush1.bf16.xpose.msra.mxu0 0
    %1061 = vmatprep.subr.bf16.mxu0 0
    %1062 = vmatpush1.bf16.xpose.msra.mxu0 0
    %1063 = vmatprep.subr.bf16.mxu0 0
    %1064 = vmatpush1.bf16.xpose.msra.mxu0 0
    %1065 = vmatprep.subr.bf16.mxu0 0
    %1066 = vmatpush1.bf16.xpose.msra.mxu0 0
    %1067 = vmatprep.subr.bf16.mxu0 0
    %1068 = vmatpush1.bf16.xpose.msra.mxu0 0
    %1069 = vmatprep.subr.bf16.mxu0 0
    %1070 = vmatpush1.bf16.xpose.msra.mxu0 0
    %1071 = vmatprep.subr.bf16.mxu0 0
    %1072 = vmatpush1.bf16.xpose.msra.mxu0 0
    %1073 = vmatprep.subr.bf16.mxu0 0
    %1074 = vmatpush1.bf16.xpose.msra.mxu0 0
    %1075 = vmatprep.subr.bf16.mxu0 0
    %1076 = vmatpush1.bf16.xpose.msra.mxu0 0
    %1077 = vmatprep.subr.bf16.mxu0 0
    %1078 = vmatpush1.bf16.xpose.msra.mxu0 0
    %1079 = vmatprep.subr.bf16.mxu0 0
    %1080 = vmatpush1.bf16.xpose.msra.mxu0 0
    %1081 = vmatprep.mubr.bf16.mxu0 0
    %1082 = vmatmul.mubr.bf16.gmra.mrb[0].mxu0 %v1044
    %v1083 = vpop.f32.mrb[0].mxu0
    %v1084 = vadd.f32 %v164, %v1083
    %v1085 = vpop.f32.mrb[0].mxu0
    %v1086 = vpop.f32.mrb[0].mxu0
    %v1087 = vpop.f32.mrb[0].mxu0
    %1088 = vdwg.mxu0
    %v1089 = vsel %vm169, %v1034, -inf
    %1090 = vmax.xlane.f32.xlu0 %v1089
    %v1091 = vpop.xlane.xlu0 %1090
    %v1092 = vsel %vm169, %v1084, -inf
    %1093 = vmax.xlane.f32.xlu0 %v1092
    %v1094 = vpop.xlane.xlu0 %1093
    %v1095 = vsub.f32 %v1034, %v1091
    %v1096 = vsub.f32 %v1084, %v1094
    %v1097 = vmul.f32 %v1095, 1.442695
    %v1098 = vpow.pop %v1097
    %v1099 = vmul.f32 %v1096, 1.442695
    %v1100 = vpow.pop %v1099
    %v1101 = vsel %vm169, %v1098, 0.0
    %1102 = vadd.xlane.f32.xlu0 %v1101
    %v1103 = vpop.xlane.xlu0 %1102
    %v1104 = vsel %vm169, %v1100, 0.0
    %1105 = vadd.xlane.f32.xlu0 %v1104
    %v1106 = vpop.xlane.xlu0 %1105
    %v1107 = vrcp.pop %v1103
    %v1108 = vrcp.pop %v1106
    %v1109 = vmul.f32 %v1098, %v1107
    %v1110 = vmul.f32 %v1100, %v1108
    %v1111 = vpack.c.bf16 %v1109, %v1109
    %v1112 = vpack.c.bf16 %v1110, %v1110
    %1113 = vrot.lane.b32.xlu0 %v149, 40
    %v1114 = vpop.permute.xlu0 %1113
    %v1116 = vsel %vm169, %v1111, 0
    %v1119 = vsel %vm293, %v1114, 0
    %1121 = vmatprep.subr.bf16.mxu0 0
    %1122 = vmatpush1.bf16.msra.mxu0 %v1119
    %1123 = vmatprep.subr.bf16.mxu0 0
    %1124 = vmatpush1.bf16.msra.mxu0 0
    %1125 = vmatprep.subr.bf16.mxu0 0
    %1126 = vmatpush1.bf16.msra.mxu0 0
    %1127 = vmatprep.subr.bf16.mxu0 0
    %1128 = vmatpush1.bf16.msra.mxu0 0
    %1129 = vmatprep.subr.bf16.mxu0 0
    %1130 = vmatpush1.bf16.msra.mxu0 0
    %1131 = vmatprep.subr.bf16.mxu0 0
    %1132 = vmatpush1.bf16.msra.mxu0 0
    %1133 = vmatprep.subr.bf16.mxu0 0
    %1134 = vmatpush1.bf16.msra.mxu0 0
    %1135 = vmatprep.subr.bf16.mxu0 0
    %1136 = vmatpush1.bf16.msra.mxu0 0
    %1137 = vmatprep.subr.bf16.mxu0 0
    %1138 = vmatpush1.bf16.msra.mxu0 0
    %1139 = vmatprep.subr.bf16.mxu0 0
    %1140 = vmatpush1.bf16.msra.mxu0 0
    %1141 = vmatprep.subr.bf16.mxu0 0
    %1142 = vmatpush1.bf16.msra.mxu0 0
    %1143 = vmatprep.subr.bf16.mxu0 0
    %1144 = vmatpush1.bf16.msra.mxu0 0
    %1145 = vmatprep.subr.bf16.mxu0 0
    %1146 = vmatpush1.bf16.msra.mxu0 0
    %1147 = vmatprep.subr.bf16.mxu0 0
    %1148 = vmatpush1.bf16.msra.mxu0 0
    %1149 = vmatprep.subr.bf16.mxu0 0
    %1150 = vmatpush1.bf16.msra.mxu0 0
    %1151 = vmatprep.subr.bf16.mxu0 0
    %1152 = vmatpush1.bf16.msra.mxu0 0
    %1153 = vmatprep.mubr.bf16.mxu0 0
    %1154 = vmatmul.mubr.bf16.gmra.mrb[0].mxu0 %v1116
    %v1155 = vpop.f32.mrb[0].mxu0
    %v1156 = vadd.f32 0.0, %v1155
    %v1157 = vpop.f32.mrb[0].mxu0
    %v1158 = vpop.f32.mrb[0].mxu0
    %v1159 = vpop.f32.mrb[0].mxu0
    %1160 = vdwg.mxu0
    %1161 = vrot.lane.b32.xlu0 %v150, 40
    %v1162 = vpop.permute.xlu0 %1161
    %v1164 = vsel %vm169, %v1112, 0
    %v1167 = vsel %vm293, %v1162, 0
    %1169 = vmatprep.subr.bf16.mxu0 0
    %1170 = vmatpush1.bf16.msra.mxu0 %v1167
    %1171 = vmatprep.subr.bf16.mxu0 0
    %1172 = vmatpush1.bf16.msra.mxu0 0
    %1173 = vmatprep.subr.bf16.mxu0 0
    %1174 = vmatpush1.bf16.msra.mxu0 0
    %1175 = vmatprep.subr.bf16.mxu0 0
    %1176 = vmatpush1.bf16.msra.mxu0 0
    %1177 = vmatprep.subr.bf16.mxu0 0
    %1178 = vmatpush1.bf16.msra.mxu0 0
    %1179 = vmatprep.subr.bf16.mxu0 0
    %1180 = vmatpush1.bf16.msra.mxu0 0
    %1181 = vmatprep.subr.bf16.mxu0 0
    %1182 = vmatpush1.bf16.msra.mxu0 0
    %1183 = vmatprep.subr.bf16.mxu0 0
    %1184 = vmatpush1.bf16.msra.mxu0 0
    %1185 = vmatprep.subr.bf16.mxu0 0
    %1186 = vmatpush1.bf16.msra.mxu0 0
    %1187 = vmatprep.subr.bf16.mxu0 0
    %1188 = vmatpush1.bf16.msra.mxu0 0
    %1189 = vmatprep.subr.bf16.mxu0 0
    %1190 = vmatpush1.bf16.msra.mxu0 0
    %1191 = vmatprep.subr.bf16.mxu0 0
    %1192 = vmatpush1.bf16.msra.mxu0 0
    %1193 = vmatprep.subr.bf16.mxu0 0
    %1194 = vmatpush1.bf16.msra.mxu0 0
    %1195 = vmatprep.subr.bf16.mxu0 0
    %1196 = vmatpush1.bf16.msra.mxu0 0
    %1197 = vmatprep.subr.bf16.mxu0 0
    %1198 = vmatpush1.bf16.msra.mxu0 0
    %1199 = vmatprep.subr.bf16.mxu0 0
    %1200 = vmatpush1.bf16.msra.mxu0 0
    %1201 = vmatprep.mubr.bf16.mxu0 0
    %1202 = vmatmul.mubr.bf16.gmra.mrb[0].mxu0 %v1164
    %v1203 = vpop.f32.mrb[0].mxu0
    %v1204 = vadd.f32 0.0, %v1203
    %v1205 = vpop.f32.mrb[0].mxu0
    %v1206 = vpop.f32.mrb[0].mxu0
    %v1207 = vpop.f32.mrb[0].mxu0
    %1208 = vdwg.mxu0
    %v1209 = vpack.c.bf16 %v1156, %v1156
    %v1210 = vpack.c.bf16 %v1204, %v1204
    %v1213 = vunpack.c.l.b16 %v1209
    %v1214 = vunpack.c.l.b16 %v1210
    %v1215 = vpack.c.b16 %v1214, %v1213
    %v1217 = vsel %vm169, %v1215, 0
    %v1220 = vsel %vm293, %v154, 0
    %1222 = vmatprep.subr.bf16.mxu0 0
    %1223 = vmatpush1.bf16.msra.mxu0 %v1220
    %1224 = vmatprep.subr.bf16.mxu0 0
    %1225 = vmatpush1.bf16.msra.mxu0 0
    %1226 = vmatprep.subr.bf16.mxu0 0
    %1227 = vmatpush1.bf16.msra.mxu0 0
    %1228 = vmatprep.subr.bf16.mxu0 0
    %1229 = vmatpush1.bf16.msra.mxu0 0
    %1230 = vmatprep.subr.bf16.mxu0 0
    %1231 = vmatpush1.bf16.msra.mxu0 0
    %1232 = vmatprep.subr.bf16.mxu0 0
    %1233 = vmatpush1.bf16.msra.mxu0 0
    %1234 = vmatprep.subr.bf16.mxu0 0
    %1235 = vmatpush1.bf16.msra.mxu0 0
    %1236 = vmatprep.subr.bf16.mxu0 0
    %1237 = vmatpush1.bf16.msra.mxu0 0
    %1238 = vmatprep.subr.bf16.mxu0 0
    %1239 = vmatpush1.bf16.msra.mxu0 0
    %1240 = vmatprep.subr.bf16.mxu0 0
    %1241 = vmatpush1.bf16.msra.mxu0 0
    %1242 = vmatprep.subr.bf16.mxu0 0
    %1243 = vmatpush1.bf16.msra.mxu0 0
    %1244 = vmatprep.subr.bf16.mxu0 0
    %1245 = vmatpush1.bf16.msra.mxu0 0
    %1246 = vmatprep.subr.bf16.mxu0 0
    %1247 = vmatpush1.bf16.msra.mxu0 0
    %1248 = vmatprep.subr.bf16.mxu0 0
    %1249 = vmatpush1.bf16.msra.mxu0 0
    %1250 = vmatprep.subr.bf16.mxu0 0
    %1251 = vmatpush1.bf16.msra.mxu0 0
    %1252 = vmatprep.subr.bf16.mxu0 0
    %1253 = vmatpush1.bf16.msra.mxu0 0
    %1254 = vmatprep.mubr.bf16.mxu0 0
    %1255 = vmatmul.mubr.bf16.gmra.mrb[0].mxu0 %v1217
    %v1256 = vpop.f32.mrb[0].mxu0
    %v1257 = vadd.f32 0.0, %v1256
    %v1258 = vpop.f32.mrb[0].mxu0
    %v1259 = vpop.f32.mrb[0].mxu0
    %v1260 = vadd.f32 0.0, %v1259
    %v1261 = vpop.f32.mrb[0].mxu0
    %1262 = vdwg.mxu0
    %v1263 = vadd.f32 %v987, %v1257
    %v1264 = vadd.f32 %v988, %v1260
    %v1265 = vld [vmem:[%s5] sm:$0x1]
    %v1267 = vlaneseq
    %v1268 = vshrl.u32 %v1267, 7
    %v1269 = vsub.s32 0, %v1268
    %v1270 = vrot.slane %v1265, %v1269
    %v1272 = vadd.f32 %v1263, %v1270
    %v1273 = vadd.f32 %v1264, %v1270
    %v1274 = vadd.f32 %v1272, %v72
    %v1275 = vadd.f32 %v1273, %v73
    %v1276 = vsel %vm100, %v1274, 0.0
    %1277 = vadd.xlane.f32.xlu0 %v1276
    %v1278 = vpop.xlane.xlu0 %1277
    %v1279 = vsel %vm100, %v1275, 0.0
    %1280 = vadd.xlane.f32.xlu0 %v1279
    %v1281 = vpop.xlane.xlu0 %1280
    %v1282 = vrcp.pop 32.0
    %v1283 = vmul.f32 %v1278, %v1282
    %v1284 = vmul.f32 %v1281, %v1282
    %v1285 = vsub.f32 %v1274, %v1283
    %v1286 = vsub.f32 %v1275, %v1284
    %v1287 = vmul.f32 %v1285, %v1285
    %v1288 = vmul.f32 %v1286, %v1286
    %v1289 = vsel %vm100, %v1287, 0.0
    %1290 = vadd.xlane.f32.xlu0 %v1289
    %v1291 = vpop.xlane.xlu0 %1290
    %v1292 = vsel %vm100, %v1288, 0.0
    %1293 = vadd.xlane.f32.xlu0 %v1292
    %v1294 = vpop.xlane.xlu0 %1293
    %v1295 = vmul.f32 %v1291, %v1282
    %v1296 = vmul.f32 %v1294, %v1282
    %v1297 = vadd.f32 %v1295, 1e-05
    %v1298 = vadd.f32 %v1296, 1e-05
    %v1299 = vrsqrt.pop %v1297
    %v1300 = vrsqrt.pop %v1298
    %v1301 = vmul.f32 %v1285, %v1299
    %v1302 = vmul.f32 %v1286, %v1300
    %v1303 = vld [vmem:[%s6] sm:$0x1]
    %v1305 = vlaneseq
    %v1306 = vshrl.u32 %v1305, 7
    %v1307 = vsub.s32 0, %v1306
    %v1308 = vrot.slane %v1303, %v1307
    %v1310 = vmul.f32 %v1301, %v1308
    %v1311 = vmul.f32 %v1302, %v1308
    %v1312 = vld [vmem:[%s7] sm:$0x1]
    %v1314 = vlaneseq
    %v1315 = vshrl.u32 %v1314, 7
    %v1316 = vsub.s32 0, %v1315
    %v1317 = vrot.slane %v1312, %v1316
    %v1319 = vadd.f32 %v1310, %v1317
    %v1320 = vadd.f32 %v1311, %v1317
    %1321 = vst.msk [vmem:[#allocation8] sm:$0xff] %vm100, %v1319
    %1322 = vst.msk [vmem:[#allocation8 + $0x8] sm:$0xff] %vm100, %v1320
    // Predicated region
    $region46: #{tpu_custom_call.1} parent=1 // pred_check
      _
    $region47: #{tpu_custom_call.1} parent=1 // pred_check_branch
      %1324 = sbr.rel (0) target = $region49
    $region48: #{tpu_custom_call.1} parent=1 // pred_region
      %s1326 = ssub.s32 256, 256
      %1327 = vsyncadd [#allocation4], %s1326
      %s1328 = sshll.u32 [#allocation8], 4
      %s1329 = int_to_ptr.vmem [resolvable:$true] %s1328
      %1334 = dma.vmem_to_hbm [thread:$0]  %s1329, 256, %s8, [#allocation4], 128, 128, 8
    $region49: #{tpu_custom_call.1} parent=1 // pred_fallthru
      _
    // Predicated region
    $region50: #{tpu_custom_call.1} parent=1 // pred_check
      _
    $region51: #{tpu_custom_call.1} parent=1 // pred_check_branch
      %1336 = sbr.rel (0) target = $region53
    $region52: #{tpu_custom_call.1} parent=1 // pred_region
      %1337 = dma.done [#allocation4], 256
    $region53: #{tpu_custom_call.1} parent=1 // pred_fallthru
      _
    %1338 = vsyncpa [#allocation3], 1
    %1339 = vsyncpa [#allocation6], 1
    %1340 = vsyncpa [#allocation4], 1

</llo_original>
